<compile_context>
chip_gen: v6e
topology: v6e:2x2x1
jax: 0.10.0
libtpu: 0.0.40
codegen_flags: <defaults>
</compile_context>

<pallas_src>
import functools

import jax
import jax.numpy as jnp
from jax import lax
from jax.experimental import pallas as pl
from jax.experimental.pallas import tpu as pltpu

EPS = 1e-5


# ----------------------------------------------------------------------------
# Pallas kernels
# ----------------------------------------------------------------------------
def conv_matmul_stats_kernel(w_ref, p_ref, y_ref, sum_ref, ssq_ref):
    """y = W (CO,K) @ patches_T (K,TM) -> (CO,TM) lane-dense, plus per-channel
    sum / sum-of-squares accumulated across the M grid axis (BN batch stats)."""
    y = jnp.dot(w_ref[...], p_ref[...], preferred_element_type=jnp.float32)
    y_ref[...] = y
    part_sum = jnp.sum(y, axis=1, keepdims=True)       # (CO, 1) lane reduce (XLU)
    part_ssq = jnp.sum(y * y, axis=1, keepdims=True)   # (CO, 1)

    @pl.when(pl.program_id(0) == 0)
    def _():
        sum_ref[...] = part_sum
        ssq_ref[...] = part_ssq

    @pl.when(pl.program_id(0) != 0)
    def _():
        sum_ref[...] += part_sum
        ssq_ref[...] += part_ssq


def bn_relu_kernel(y_ref, sum_ref, ssq_ref, g_ref, b_ref, o_ref, *, inv_count):
    """Train-mode BatchNorm (global batch statistics, biased variance) folded
    into one affine, then ReLU.  Operates on a lane-dense (CO, TM) tile."""
    mean = sum_ref[...] * inv_count
    var = ssq_ref[...] * inv_count - mean * mean         # biased variance
    scale = g_ref[...] * lax.rsqrt(var + EPS)
    shift = b_ref[...] - mean * scale
    o_ref[...] = jnp.maximum(y_ref[...] * scale + shift, 0.0).astype(o_ref.dtype)


def mlp_head_kernel(x_ref, w1_ref, g_ref, b_ref, w2_ref, b2_ref, o_ref):
    """fc1 + BatchNorm1d(train) + ReLU + fc2 + sigmoid, transposed layout.

    x_ref : (F, N) bf16   flattened conv features (batch on lanes)
    w1_ref: (D, F) bf16   fc1 weight (fc1 bias is cancelled by BN)
    g/b   : (D, 1) f32    BN gamma / beta
    w2_ref: (D, 1) f32    fc2 weight as a column
    b2_ref: (1, 1) f32
    o_ref : (1, N) f32
    """
    h = jnp.dot(w1_ref[...], x_ref[...], preferred_element_type=jnp.float32)  # (D, N)
    mean = jnp.mean(h, axis=1, keepdims=True)
    var = jnp.mean(h * h, axis=1, keepdims=True) - mean * mean
    scale = g_ref[...] * lax.rsqrt(var + EPS)
    shift = b_ref[...] - mean * scale
    hr = jnp.maximum(h * scale + shift, 0.0)                                   # (D, N)
    # fc2 (D -> 1): VPU multiply + sublane reduction instead of a 1-column MXU matmul.
    logits = jnp.sum(hr * w2_ref[...], axis=0, keepdims=True) + b2_ref[...]    # (1, N)
    o_ref[...] = jax.nn.sigmoid(logits)


# ----------------------------------------------------------------------------
# pallas_call wrappers
# ----------------------------------------------------------------------------
def _full_spec(shape):
    return pl.BlockSpec(shape, lambda: (0,) * len(shape))


def _pick_m_tile(m, cap):
    """Largest multiple of 128 dividing m and <= cap; else one full block."""
    best = None
    t = 128
    while t <= min(m, cap):
        if m % t == 0:
            best = t
        t += 128
    return best if best is not None else m


def _mosaic_params(semantics, block_bytes):
    return pltpu.CompilerParams(
        dimension_semantics=semantics,
        vmem_limit_bytes=int(min(100 << 20, max(8 << 20, 6 * block_bytes))),
    )


def conv_bn_relu(patches_t, w_t, gamma, beta, *, m_tile):
    """Conv-as-matmul (transposed, lane-dense) + BatchNorm2d(train) + ReLU.

    patches_t : (K, M)  bf16 transposed im2col patches (M on lanes)
    w_t       : (CO, K) bf16 reshaped conv weight
    gamma/beta: (CO,)   f32  BN affine parameters
    returns   : (CO, M) bf16 activations
    """
    k, m = patches_t.shape
    co = w_t.shape[0]
    tm = _pick_m_tile(m, m_tile)
    grid = (m // tm,)

    mm_block_bytes = co * k * 2 + k * tm * 2 + co * tm * 4 + 2 * co * 4
    y, s, ss = pl.pallas_call(
        conv_matmul_stats_kernel,
        out_shape=(
            jax.ShapeDtypeStruct((co, m), jnp.float32),
            jax.ShapeDtypeStruct((co, 1), jnp.float32),
            jax.ShapeDtypeStruct((co, 1), jnp.float32),
        ),
        grid=grid,
        in_specs=[
            pl.BlockSpec((co, k), lambda i: (0, 0)),
            pl.BlockSpec((k, tm), lambda i: (0, i)),
        ],
        out_specs=(
            pl.BlockSpec((co, tm), lambda i: (0, i)),
            pl.BlockSpec((co, 1), lambda i: (0, 0)),   # stats accumulator (resident)
            pl.BlockSpec((co, 1), lambda i: (0, 0)),
        ),
        compiler_params=_mosaic_params(("arbitrary",), mm_block_bytes),
        cost_estimate=pl.CostEstimate(
            flops=2 * co * k * m,
            transcendentals=0,
            bytes_accessed=k * m * 2 + co * k * 2 + co * m * 4 + 2 * co * 4,
        ),
    )(w_t, patches_t)

    bn_block_bytes = co * tm * 4 + 4 * co * 4 + co * tm * 2
    act = pl.pallas_call(
        functools.partial(bn_relu_kernel, inv_count=1.0 / m),
        out_shape=jax.ShapeDtypeStruct((co, m), jnp.bfloat16),
        grid=grid,
        in_specs=[
            pl.BlockSpec((co, tm), lambda i: (0, i)),
            pl.BlockSpec((co, 1), lambda i: (0, 0)),
            pl.BlockSpec((co, 1), lambda i: (0, 0)),
            pl.BlockSpec((co, 1), lambda i: (0, 0)),
            pl.BlockSpec((co, 1), lambda i: (0, 0)),
        ],
        out_specs=pl.BlockSpec((co, tm), lambda i: (0, i)),
        compiler_params=_mosaic_params(("parallel",), bn_block_bytes),
    )(y, s, ss, gamma.reshape(co, 1), beta.reshape(co, 1))
    return act


def mlp_head(feat_t, w1, gamma, beta, w2_col, b2):
    f, n_batch = feat_t.shape
    d_hidden = w1.shape[0]
    block_bytes = f * n_batch * 2 + d_hidden * f * 2 + 4 * d_hidden * 4 + n_batch * 4 + 4
    return pl.pallas_call(
        mlp_head_kernel,
        out_shape=jax.ShapeDtypeStruct((1, n_batch), jnp.float32),
        in_specs=[
            _full_spec((f, n_batch)),
            _full_spec((d_hidden, f)),
            _full_spec((d_hidden, 1)),
            _full_spec((d_hidden, 1)),
            _full_spec((d_hidden, 1)),
            _full_spec((1, 1)),
        ],
        out_specs=_full_spec((1, n_batch)),
        compiler_params=_mosaic_params(None, block_bytes),
    )(feat_t, w1, gamma.reshape(d_hidden, 1), beta.reshape(d_hidden, 1),
      w2_col, b2.reshape(1, 1))


# ----------------------------------------------------------------------------
# Glue: channel-major transposed im2col (pure data movement / layout)
# ----------------------------------------------------------------------------
def conv_patches_t(a_cm, kh, kw, stride, pad, col_order):
    """a_cm: (C, N, H, W) channel-major activation -> (C*kh*kw, M) patches^T.

    Rows are ordered (c, ki, kj) (matches PyTorch OIHW weight flatten).
    Columns ordered (n, i, j) for "nij" or (i, j, n) for "ijn".
    """
    ap = jnp.pad(a_cm, ((0, 0), (0, 0), (pad, pad), (pad, pad)))
    c, n_b, hp, wp = ap.shape
    oh = (hp - kh) // stride + 1
    ow = (wp - kw) // stride + 1
    taps = []
    for ki in range(kh):
        for kj in range(kw):
            taps.append(ap[:, :, ki:ki + stride * (oh - 1) + 1:stride,
                           kj:kj + stride * (ow - 1) + 1:stride])
    p = jnp.stack(taps, axis=1)                    # (C, kh*kw, N, oh, ow)
    if col_order == "ijn":
        p = p.transpose(0, 1, 3, 4, 2)             # (C, kh*kw, oh, ow, N)
    return p.reshape(c * kh * kw, n_b * oh * ow), oh, ow


# ----------------------------------------------------------------------------
# Full forward pass (Pallas-backed)
# ----------------------------------------------------------------------------
def discriminator_forward(x, params, d, n, m_tile=512):
    batch = x.shape[0]
    bf16 = jnp.bfloat16

    # conv1 + bn1 + relu  (output columns ordered (n, i, j))
    x_cm = jnp.transpose(x, (1, 0, 2, 3)).astype(bf16)     # (1, N, H, W); C_in=1 so layout no-op
    # TODO(synk): the stride-2 window gather stays as XLA glue; pulling it inside
    # the kernel (manual-DMA gather) would cut conv-input HBM traffic further but
    # is not expressible with BlockSpec indexing.
    p1, oh1, ow1 = conv_patches_t(x_cm, 4, 4, 2, 1, "nij")
    w1t = params['conv1_w'].reshape(d, -1).astype(bf16)    # (d, 16); conv bias cancelled by BN
    a1 = conv_bn_relu(p1, w1t, params['bn1_g'], params['bn1_b'], m_tile=m_tile)

    # conv2 + bn2 + relu  (output columns ordered (i, j, n) so the fc1 flatten
    # below is a free reshape -- no activation transpose between layers)
    a1_cm = a1.reshape(d, batch, oh1, ow1)                 # free reshape
    p2, oh2, ow2 = conv_patches_t(a1_cm, 4, 4, 2, 1, "ijn")
    w2t = params['conv2_w'].reshape(d, -1).astype(bf16)    # (d, d*16)
    a2 = conv_bn_relu(p2, w2t, params['bn2_g'], params['bn2_b'], m_tile=m_tile)

    # flatten to (F, N) with rows in PyTorch's (c, i, j) view order (free reshape)
    feat_t = a2.reshape(d * oh2 * ow2, batch)

    # fc1 + bn3 + relu + fc2 + sigmoid  (fc1 bias cancelled by BN; fc2 bias kept)
    out_1n = mlp_head(feat_t, params['fc1_w'].astype(bf16),
                      params['bn3_g'], params['bn3_b'],
                      params['fc2_w'].reshape(d, 1), params['fc2_b'])
    return out_1n.reshape(batch, 1)


# ----------------------------------------------------------------------------
# Pure-JAX f32 reference (PyTorch semantics, for correctness check)
# ----------------------------------------------------------------------------
def _bn(x, gamma, beta, axes):
    mean = jnp.mean(x, axis=axes, keepdims=True)
    var = jnp.mean((x - mean) ** 2, axis=axes, keepdims=True)
    return gamma * (x - mean) * lax.rsqrt(var + EPS) + beta


def reference_forward(x, params, d, n):
    dn = ('NCHW', 'OIHW', 'NCHW')
    y = lax.conv_general_dilated(x, params['conv1_w'], (2, 2),
                                 ((1, 1), (1, 1)), dimension_numbers=dn)
    y = y + params['conv1_b'][None, :, None, None]
    y = jnp.maximum(_bn(y, params['bn1_g'][None, :, None, None],
                        params['bn1_b'][None, :, None, None], (0, 2, 3)), 0.0)
    y = lax.conv_general_dilated(y, params['conv2_w'], (2, 2),
                                 ((1, 1), (1, 1)), dimension_numbers=dn)
    y = y + params['conv2_b'][None, :, None, None]
    y = jnp.maximum(_bn(y, params['bn2_g'][None, :, None, None],
                        params['bn2_b'][None, :, None, None], (0, 2, 3)), 0.0)
    y = y.reshape(y.shape[0], -1)
    y = y @ params['fc1_w'].T + params['fc1_b']
    y = jnp.maximum(_bn(y, params['bn3_g'][None, :],
                        params['bn3_b'][None, :], (0,)), 0.0)
    y = y @ params['fc2_w'].T + params['fc2_b']
    return jax.nn.sigmoid(y)


# ----------------------------------------------------------------------------
def init_params(key, d, n):
    F = d * (n // 4) ** 2
    ks = jax.random.split(key, 12)
    r = lambda k, s, sc=0.1: sc * jax.random.normal(k, s, jnp.float32)
    return {
        'conv1_w': r(ks[0], (d, 1, 4, 4)),
        'conv1_b': r(ks[1], (d,)),
        'bn1_g': 1.0 + r(ks[2], (d,)),
        'bn1_b': r(ks[3], (d,)),
        'conv2_w': r(ks[4], (d, d, 4, 4)),
        'conv2_b': r(ks[5], (d,)),
        'bn2_g': 1.0 + r(ks[6], (d,)),
        'bn2_b': r(ks[7], (d,)),
        'fc1_w': r(ks[8], (d, F)),
        'fc1_b': r(ks[9], (d,)),
        'bn3_g': 1.0 + r(ks[10], (d,)),
        'bn3_b': r(ks[11], (d,)),
        'fc2_w': 0.1 * jnp.ones((1, d), jnp.float32),
        'fc2_b': jnp.zeros((1,), jnp.float32),
    }


if __name__ == "__main__":
    d, n, batch = 8, 16, 4
    key = jax.random.PRNGKey(0)
    kx, kp = jax.random.split(key)
    x = jax.random.normal(kx, (batch, 1, n, n), jnp.float32)
    params = init_params(kp, d, n)

    # m_tile=128 so conv1 (M=256) exercises the multi-tile BN-stats accumulate
    # path; at production sizes use 512-1024 rows per tile.
    fwd = jax.jit(functools.partial(discriminator_forward, d=d, n=n, m_tile=128))
    out = jax.block_until_ready(fwd(x, params))

    ref = jax.block_until_ready(reference_forward(x, params, d, n))
    assert out.shape == (batch, 1), out.shape
    # bf16 matmul operands / bf16 activations -> compare at bf16-level tolerance.
    assert jnp.allclose(out, ref, atol=2e-2, rtol=2e-2), (out, ref)
    print("KERNEL_OK")
</pallas_src>

<mosaic_0001>
module attributes {stable_mosaic.version = 11 : i64} {
  func.func @conv_matmul_stats_kernel(%arg0: i32, %arg1: memref<8x16xbf16, #tpu.memory_space<vmem>>, %arg2: memref<16x128xbf16, #tpu.memory_space<vmem>>, %arg3: memref<8x128xf32, #tpu.memory_space<vmem>>, %arg4: memref<8x1xf32, #tpu.memory_space<vmem>>, %arg5: memref<8x1xf32, #tpu.memory_space<vmem>>) attributes {dimension_semantics = [#tpu.dimension_semantics<arbitrary>], iteration_bounds = array<i64: 2>, scalar_prefetch = 0 : i64, scratch_operands = 0 : i64, tpu.core_type = #tpu.core_type<tc>, window_params = [{pipeline_mode = #tpu.pipeline_mode<synchronous>, transform_indices = @transform_0, window_bounds = array<i64: 8, 16>}, {transform_indices = @transform_1, window_bounds = array<i64: 16, 128>}, {transform_indices = @transform_2, window_bounds = array<i64: 8, 128>}, {pipeline_mode = #tpu.pipeline_mode<synchronous>, transform_indices = @transform_3, window_bounds = array<i64: 8, 1>}, {pipeline_mode = #tpu.pipeline_mode<synchronous>, transform_indices = @transform_4, window_bounds = array<i64: 8, 1>}]} {
    %c0 = arith.constant 0 : index
    %c0_0 = arith.constant 0 : index
    %0 = vector.load %arg1[%c0, %c0_0] : memref<8x16xbf16, #tpu.memory_space<vmem>>, vector<8x16xbf16>
    %c0_1 = arith.constant 0 : index
    %c0_2 = arith.constant 0 : index
    %1 = vector.load %arg2[%c0_1, %c0_2] : memref<16x128xbf16, #tpu.memory_space<vmem>>, vector<16x128xbf16>
    %cst = arith.constant dense<0.000000e+00> : vector<8x128xf32>
    %2 = tpu.matmul %0, %1, %cst {dimension_numbers = #tpu.dot_dimension_numbers<[1], [0], [0], [1], [0, 0, 1, 1], [], []>} : vector<8x16xbf16>, vector<16x128xbf16>, vector<8x128xf32> -> vector<8x128xf32>
    %c0_3 = arith.constant 0 : index
    %c0_4 = arith.constant 0 : index
    %3 = vector.load %arg3[%c0_3, %c0_4] : memref<8x128xf32, #tpu.memory_space<vmem>>, vector<8x128xf32>
    tpu.vector_store %arg3[%c0_3, %c0_4], %2 {strides = array<i32>} : memref<8x128xf32, #tpu.memory_space<vmem>>, vector<8x128xf32>,
    %cst_5 = arith.constant dense<0.000000e+00> : vector<8xf32>
    %4 = vector.multi_reduction <add>, %2, %cst_5 [1] : vector<8x128xf32> to vector<8xf32>
    %5 = vector.shape_cast %4 : vector<8xf32> to vector<8x1xf32>
    %6 = arith.mulf %2, %2 : vector<8x128xf32>
    %cst_6 = arith.constant dense<0.000000e+00> : vector<8xf32>
    %7 = vector.multi_reduction <add>, %6, %cst_6 [1] : vector<8x128xf32> to vector<8xf32>
    %8 = vector.shape_cast %7 : vector<8xf32> to vector<8x1xf32>
    %c0_i32 = arith.constant 0 : i32
    %9 = arith.cmpi eq, %arg0, %c0_i32 : i32
    %10 = arith.extui %9 : i1 to i32
    %c0_i32_7 = arith.constant 0 : i32
    %11 = arith.cmpi ne, %10, %c0_i32_7 : i32
    scf.if %11 {
      %c0_10 = arith.constant 0 : index
      %c0_11 = arith.constant 0 : index
      %15 = vector.load %arg4[%c0_10, %c0_11] : memref<8x1xf32, #tpu.memory_space<vmem>>, vector<8x1xf32>
      tpu.vector_store %arg4[%c0_10, %c0_11], %5 {strides = array<i32>} : memref<8x1xf32, #tpu.memory_space<vmem>>, vector<8x1xf32>,
      %c0_12 = arith.constant 0 : index
      %c0_13 = arith.constant 0 : index
      %16 = vector.load %arg5[%c0_12, %c0_13] : memref<8x1xf32, #tpu.memory_space<vmem>>, vector<8x1xf32>
      tpu.vector_store %arg5[%c0_12, %c0_13], %8 {strides = array<i32>} : memref<8x1xf32, #tpu.memory_space<vmem>>, vector<8x1xf32>,
    } else {
    }
    %c0_i32_8 = arith.constant 0 : i32
    %12 = arith.cmpi ne, %arg0, %c0_i32_8 : i32
    %13 = arith.extui %12 : i1 to i32
    %c0_i32_9 = arith.constant 0 : i32
    %14 = arith.cmpi ne, %13, %c0_i32_9 : i32
    scf.if %14 {
      %c0_10 = arith.constant 0 : index
      %c0_11 = arith.constant 0 : index
      %15 = vector.load %arg4[%c0_10, %c0_11] : memref<8x1xf32, #tpu.memory_space<vmem>>, vector<8x1xf32>
      %16 = arith.addf %15, %5 : vector<8x1xf32>
      %c0_12 = arith.constant 0 : index
      %c0_13 = arith.constant 0 : index
      %17 = vector.load %arg4[%c0_12, %c0_13] : memref<8x1xf32, #tpu.memory_space<vmem>>, vector<8x1xf32>
      tpu.vector_store %arg4[%c0_12, %c0_13], %16 {strides = array<i32>} : memref<8x1xf32, #tpu.memory_space<vmem>>, vector<8x1xf32>,
      %c0_14 = arith.constant 0 : index
      %c0_15 = arith.constant 0 : index
      %18 = vector.load %arg5[%c0_14, %c0_15] : memref<8x1xf32, #tpu.memory_space<vmem>>, vector<8x1xf32>
      %19 = arith.addf %18, %8 : vector<8x1xf32>
      %c0_16 = arith.constant 0 : index
      %c0_17 = arith.constant 0 : index
      %20 = vector.load %arg5[%c0_16, %c0_17] : memref<8x1xf32, #tpu.memory_space<vmem>>, vector<8x1xf32>
      tpu.vector_store %arg5[%c0_16, %c0_17], %19 {strides = array<i32>} : memref<8x1xf32, #tpu.memory_space<vmem>>, vector<8x1xf32>,
    } else {
    }
    return
  }
  func.func @transform_0(%arg0: i32) -> (i32, i32) {
    %c0_i32 = arith.constant 0 : i32
    %c0_i32_0 = arith.constant 0 : i32
    %c0_i32_1 = arith.constant 0 : i32
    return %c0_i32, %c0_i32_0 : i32, i32
  }
  func.func @transform_1(%arg0: i32) -> (i32, i32) {
    %c0_i32 = arith.constant 0 : i32
    %c0_i32_0 = arith.constant 0 : i32
    return %c0_i32, %arg0 : i32, i32
  }
  func.func @transform_2(%arg0: i32) -> (i32, i32) {
    %c0_i32 = arith.constant 0 : i32
    %c0_i32_0 = arith.constant 0 : i32
    return %c0_i32, %arg0 : i32, i32
  }
  func.func @transform_3(%arg0: i32) -> (i32, i32) {
    %c0_i32 = arith.constant 0 : i32
    %c0_i32_0 = arith.constant 0 : i32
    %c0_i32_1 = arith.constant 0 : i32
    return %c0_i32, %c0_i32_0 : i32, i32
  }
  func.func @transform_4(%arg0: i32) -> (i32, i32) {
    %c0_i32 = arith.constant 0 : i32
    %c0_i32_0 = arith.constant 0 : i32
    %c0_i32_1 = arith.constant 0 : i32
    return %c0_i32, %c0_i32_0 : i32, i32
  }
}

module attributes {stable_mosaic.version = 11 : i64} {
  func.func @bn_relu_kernel(%arg0: i32, %arg1: memref<8x128xf32, #tpu.memory_space<vmem>>, %arg2: memref<8x1xf32, #tpu.memory_space<vmem>>, %arg3: memref<8x1xf32, #tpu.memory_space<vmem>>, %arg4: memref<8x1xf32, #tpu.memory_space<vmem>>, %arg5: memref<8x1xf32, #tpu.memory_space<vmem>>, %arg6: memref<8x128xbf16, #tpu.memory_space<vmem>>) attributes {dimension_semantics = [#tpu.dimension_semantics<parallel>], iteration_bounds = array<i64: 2>, scalar_prefetch = 0 : i64, scratch_operands = 0 : i64, tpu.core_type = #tpu.core_type<tc>, window_params = [{transform_indices = @transform_0, window_bounds = array<i64: 8, 128>}, {pipeline_mode = #tpu.pipeline_mode<synchronous>, transform_indices = @transform_1, window_bounds = array<i64: 8, 1>}, {pipeline_mode = #tpu.pipeline_mode<synchronous>, transform_indices = @transform_2, window_bounds = array<i64: 8, 1>}, {pipeline_mode = #tpu.pipeline_mode<synchronous>, transform_indices = @transform_3, window_bounds = array<i64: 8, 1>}, {pipeline_mode = #tpu.pipeline_mode<synchronous>, transform_indices = @transform_4, window_bounds = array<i64: 8, 1>}, {transform_indices = @transform_5, window_bounds = array<i64: 8, 128>}]} {
    %c0 = arith.constant 0 : index
    %c0_0 = arith.constant 0 : index
    %0 = vector.load %arg2[%c0, %c0_0] : memref<8x1xf32, #tpu.memory_space<vmem>>, vector<8x1xf32>
    %cst = arith.constant 3.906250e-03 : f32
    %1 = vector.broadcast %cst : f32 to vector<8x1xf32>
    %2 = arith.mulf %0, %1 : vector<8x1xf32>
    %c0_1 = arith.constant 0 : index
    %c0_2 = arith.constant 0 : index
    %3 = vector.load %arg3[%c0_1, %c0_2] : memref<8x1xf32, #tpu.memory_space<vmem>>, vector<8x1xf32>
    %cst_3 = arith.constant 3.906250e-03 : f32
    %4 = vector.broadcast %cst_3 : f32 to vector<8x1xf32>
    %5 = arith.mulf %3, %4 : vector<8x1xf32>
    %6 = arith.mulf %2, %2 : vector<8x1xf32>
    %7 = arith.subf %5, %6 : vector<8x1xf32>
    %c0_4 = arith.constant 0 : index
    %c0_5 = arith.constant 0 : index
    %8 = vector.load %arg4[%c0_4, %c0_5] : memref<8x1xf32, #tpu.memory_space<vmem>>, vector<8x1xf32>
    %cst_6 = arith.constant 9.99999974E-6 : f32
    %9 = vector.broadcast %cst_6 : f32 to vector<8x1xf32>
    %10 = arith.addf %7, %9 : vector<8x1xf32>
    %11 = math.rsqrt %10 : vector<8x1xf32>
    %12 = arith.mulf %8, %11 : vector<8x1xf32>
    %c0_7 = arith.constant 0 : index
    %c0_8 = arith.constant 0 : index
    %13 = vector.load %arg5[%c0_7, %c0_8] : memref<8x1xf32, #tpu.memory_space<vmem>>, vector<8x1xf32>
    %14 = arith.mulf %2, %12 : vector<8x1xf32>
    %15 = arith.subf %13, %14 : vector<8x1xf32>
    %c0_9 = arith.constant 0 : index
    %c0_10 = arith.constant 0 : index
    %16 = vector.load %arg1[%c0_9, %c0_10] : memref<8x128xf32, #tpu.memory_space<vmem>>, vector<8x128xf32>
    %17 = vector.broadcast %12 : vector<8x1xf32> to vector<8x128xf32>
    %18 = arith.mulf %16, %17 : vector<8x128xf32>
    %19 = vector.broadcast %15 : vector<8x1xf32> to vector<8x128xf32>
    %20 = arith.addf %18, %19 : vector<8x128xf32>
    %cst_11 = arith.constant 0.000000e+00 : f32
    %21 = vector.broadcast %cst_11 : f32 to vector<8x128xf32>
    %22 = arith.maximumf %20, %21 : vector<8x128xf32>
    %23 = arith.truncf %22 : vector<8x128xf32> to vector<8x128xbf16>
    %c0_12 = arith.constant 0 : index
    %c0_13 = arith.constant 0 : index
    %24 = vector.load %arg6[%c0_12, %c0_13] : memref<8x128xbf16, #tpu.memory_space<vmem>>, vector<8x128xbf16>
    tpu.vector_store %arg6[%c0_12, %c0_13], %23 {strides = array<i32>} : memref<8x128xbf16, #tpu.memory_space<vmem>>, vector<8x128xbf16>,
    return
  }
  func.func @transform_0(%arg0: i32) -> (i32, i32) {
    %c0_i32 = arith.constant 0 : i32
    %c0_i32_0 = arith.constant 0 : i32
    return %c0_i32, %arg0 : i32, i32
  }
  func.func @transform_1(%arg0: i32) -> (i32, i32) {
    %c0_i32 = arith.constant 0 : i32
    %c0_i32_0 = arith.constant 0 : i32
    %c0_i32_1 = arith.constant 0 : i32
    return %c0_i32, %c0_i32_0 : i32, i32
  }
  func.func @transform_2(%arg0: i32) -> (i32, i32) {
    %c0_i32 = arith.constant 0 : i32
    %c0_i32_0 = arith.constant 0 : i32
    %c0_i32_1 = arith.constant 0 : i32
    return %c0_i32, %c0_i32_0 : i32, i32
  }
  func.func @transform_3(%arg0: i32) -> (i32, i32) {
    %c0_i32 = arith.constant 0 : i32
    %c0_i32_0 = arith.constant 0 : i32
    %c0_i32_1 = arith.constant 0 : i32
    return %c0_i32, %c0_i32_0 : i32, i32
  }
  func.func @transform_4(%arg0: i32) -> (i32, i32) {
    %c0_i32 = arith.constant 0 : i32
    %c0_i32_0 = arith.constant 0 : i32
    %c0_i32_1 = arith.constant 0 : i32
    return %c0_i32, %c0_i32_0 : i32, i32
  }
  func.func @transform_5(%arg0: i32) -> (i32, i32) {
    %c0_i32 = arith.constant 0 : i32
    %c0_i32_0 = arith.constant 0 : i32
    return %c0_i32, %arg0 : i32, i32
  }
}

module attributes {stable_mosaic.version = 11 : i64} {
  func.func @conv_matmul_stats_kernel(%arg0: i32, %arg1: memref<8x128xbf16, #tpu.memory_space<vmem>>, %arg2: memref<128x64xbf16, #tpu.memory_space<vmem>>, %arg3: memref<8x64xf32, #tpu.memory_space<vmem>>, %arg4: memref<8x1xf32, #tpu.memory_space<vmem>>, %arg5: memref<8x1xf32, #tpu.memory_space<vmem>>) attributes {dimension_semantics = [#tpu.dimension_semantics<arbitrary>], iteration_bounds = array<i64: 1>, scalar_prefetch = 0 : i64, scratch_operands = 0 : i64, tpu.core_type = #tpu.core_type<tc>, window_params = [{pipeline_mode = #tpu.pipeline_mode<synchronous>, transform_indices = @transform_0, window_bounds = array<i64: 8, 128>}, {transform_indices = @transform_1, window_bounds = array<i64: 128, 64>}, {transform_indices = @transform_2, window_bounds = array<i64: 8, 64>}, {pipeline_mode = #tpu.pipeline_mode<synchronous>, transform_indices = @transform_3, window_bounds = array<i64: 8, 1>}, {pipeline_mode = #tpu.pipeline_mode<synchronous>, transform_indices = @transform_4, window_bounds = array<i64: 8, 1>}]} {
    %c0 = arith.constant 0 : index
    %c0_0 = arith.constant 0 : index
    %0 = vector.load %arg1[%c0, %c0_0] : memref<8x128xbf16, #tpu.memory_space<vmem>>, vector<8x128xbf16>
    %c0_1 = arith.constant 0 : index
    %c0_2 = arith.constant 0 : index
    %1 = vector.load %arg2[%c0_1, %c0_2] : memref<128x64xbf16, #tpu.memory_space<vmem>>, vector<128x64xbf16>
    %cst = arith.constant dense<0.000000e+00> : vector<8x64xf32>
    %2 = tpu.matmul %0, %1, %cst {dimension_numbers = #tpu.dot_dimension_numbers<[1], [0], [0], [1], [0, 0, 1, 1], [], []>} : vector<8x128xbf16>, vector<128x64xbf16>, vector<8x64xf32> -> vector<8x64xf32>
    %c0_3 = arith.constant 0 : index
    %c0_4 = arith.constant 0 : index
    %3 = vector.load %arg3[%c0_3, %c0_4] : memref<8x64xf32, #tpu.memory_space<vmem>>, vector<8x64xf32>
    tpu.vector_store %arg3[%c0_3, %c0_4], %2 {strides = array<i32>} : memref<8x64xf32, #tpu.memory_space<vmem>>, vector<8x64xf32>,
    %cst_5 = arith.constant dense<0.000000e+00> : vector<8xf32>
    %4 = vector.multi_reduction <add>, %2, %cst_5 [1] : vector<8x64xf32> to vector<8xf32>
    %5 = vector.shape_cast %4 : vector<8xf32> to vector<8x1xf32>
    %6 = arith.mulf %2, %2 : vector<8x64xf32>
    %cst_6 = arith.constant dense<0.000000e+00> : vector<8xf32>
    %7 = vector.multi_reduction <add>, %6, %cst_6 [1] : vector<8x64xf32> to vector<8xf32>
    %8 = vector.shape_cast %7 : vector<8xf32> to vector<8x1xf32>
    %c0_i32 = arith.constant 0 : i32
    %9 = arith.cmpi eq, %arg0, %c0_i32 : i32
    %10 = arith.extui %9 : i1 to i32
    %c0_i32_7 = arith.constant 0 : i32
    %11 = arith.cmpi ne, %10, %c0_i32_7 : i32
    scf.if %11 {
      %c0_10 = arith.constant 0 : index
      %c0_11 = arith.constant 0 : index
      %15 = vector.load %arg4[%c0_10, %c0_11] : memref<8x1xf32, #tpu.memory_space<vmem>>, vector<8x1xf32>
      tpu.vector_store %arg4[%c0_10, %c0_11], %5 {strides = array<i32>} : memref<8x1xf32, #tpu.memory_space<vmem>>, vector<8x1xf32>,
      %c0_12 = arith.constant 0 : index
      %c0_13 = arith.constant 0 : index
      %16 = vector.load %arg5[%c0_12, %c0_13] : memref<8x1xf32, #tpu.memory_space<vmem>>, vector<8x1xf32>
      tpu.vector_store %arg5[%c0_12, %c0_13], %8 {strides = array<i32>} : memref<8x1xf32, #tpu.memory_space<vmem>>, vector<8x1xf32>,
    } else {
    }
    %c0_i32_8 = arith.constant 0 : i32
    %12 = arith.cmpi ne, %arg0, %c0_i32_8 : i32
    %13 = arith.extui %12 : i1 to i32
    %c0_i32_9 = arith.constant 0 : i32
    %14 = arith.cmpi ne, %13, %c0_i32_9 : i32
    scf.if %14 {
      %c0_10 = arith.constant 0 : index
      %c0_11 = arith.constant 0 : index
      %15 = vector.load %arg4[%c0_10, %c0_11] : memref<8x1xf32, #tpu.memory_space<vmem>>, vector<8x1xf32>
      %16 = arith.addf %15, %5 : vector<8x1xf32>
      %c0_12 = arith.constant 0 : index
      %c0_13 = arith.constant 0 : index
      %17 = vector.load %arg4[%c0_12, %c0_13] : memref<8x1xf32, #tpu.memory_space<vmem>>, vector<8x1xf32>
      tpu.vector_store %arg4[%c0_12, %c0_13], %16 {strides = array<i32>} : memref<8x1xf32, #tpu.memory_space<vmem>>, vector<8x1xf32>,
      %c0_14 = arith.constant 0 : index
      %c0_15 = arith.constant 0 : index
      %18 = vector.load %arg5[%c0_14, %c0_15] : memref<8x1xf32, #tpu.memory_space<vmem>>, vector<8x1xf32>
      %19 = arith.addf %18, %8 : vector<8x1xf32>
      %c0_16 = arith.constant 0 : index
      %c0_17 = arith.constant 0 : index
      %20 = vector.load %arg5[%c0_16, %c0_17] : memref<8x1xf32, #tpu.memory_space<vmem>>, vector<8x1xf32>
      tpu.vector_store %arg5[%c0_16, %c0_17], %19 {strides = array<i32>} : memref<8x1xf32, #tpu.memory_space<vmem>>, vector<8x1xf32>,
    } else {
    }
    return
  }
  func.func @transform_0(%arg0: i32) -> (i32, i32) {
    %c0_i32 = arith.constant 0 : i32
    %c0_i32_0 = arith.constant 0 : i32
    %c0_i32_1 = arith.constant 0 : i32
    return %c0_i32, %c0_i32_0 : i32, i32
  }
  func.func @transform_1(%arg0: i32) -> (i32, i32) {
    %c0_i32 = arith.constant 0 : i32
    %c0_i32_0 = arith.constant 0 : i32
    return %c0_i32, %arg0 : i32, i32
  }
  func.func @transform_2(%arg0: i32) -> (i32, i32) {
    %c0_i32 = arith.constant 0 : i32
    %c0_i32_0 = arith.constant 0 : i32
    return %c0_i32, %arg0 : i32, i32
  }
  func.func @transform_3(%arg0: i32) -> (i32, i32) {
    %c0_i32 = arith.constant 0 : i32
    %c0_i32_0 = arith.constant 0 : i32
    %c0_i32_1 = arith.constant 0 : i32
    return %c0_i32, %c0_i32_0 : i32, i32
  }
  func.func @transform_4(%arg0: i32) -> (i32, i32) {
    %c0_i32 = arith.constant 0 : i32
    %c0_i32_0 = arith.constant 0 : i32
    %c0_i32_1 = arith.constant 0 : i32
    return %c0_i32, %c0_i32_0 : i32, i32
  }
}

module attributes {stable_mosaic.version = 11 : i64} {
  func.func @bn_relu_kernel(%arg0: i32, %arg1: memref<8x64xf32, #tpu.memory_space<vmem>>, %arg2: memref<8x1xf32, #tpu.memory_space<vmem>>, %arg3: memref<8x1xf32, #tpu.memory_space<vmem>>, %arg4: memref<8x1xf32, #tpu.memory_space<vmem>>, %arg5: memref<8x1xf32, #tpu.memory_space<vmem>>, %arg6: memref<8x64xbf16, #tpu.memory_space<vmem>>) attributes {dimension_semantics = [#tpu.dimension_semantics<parallel>], iteration_bounds = array<i64: 1>, scalar_prefetch = 0 : i64, scratch_operands = 0 : i64, tpu.core_type = #tpu.core_type<tc>, window_params = [{transform_indices = @transform_0, window_bounds = array<i64: 8, 64>}, {pipeline_mode = #tpu.pipeline_mode<synchronous>, transform_indices = @transform_1, window_bounds = array<i64: 8, 1>}, {pipeline_mode = #tpu.pipeline_mode<synchronous>, transform_indices = @transform_2, window_bounds = array<i64: 8, 1>}, {pipeline_mode = #tpu.pipeline_mode<synchronous>, transform_indices = @transform_3, window_bounds = array<i64: 8, 1>}, {pipeline_mode = #tpu.pipeline_mode<synchronous>, transform_indices = @transform_4, window_bounds = array<i64: 8, 1>}, {transform_indices = @transform_5, window_bounds = array<i64: 8, 64>}]} {
    %c0 = arith.constant 0 : index
    %c0_0 = arith.constant 0 : index
    %0 = vector.load %arg2[%c0, %c0_0] : memref<8x1xf32, #tpu.memory_space<vmem>>, vector<8x1xf32>
    %cst = arith.constant 1.562500e-02 : f32
    %1 = vector.broadcast %cst : f32 to vector<8x1xf32>
    %2 = arith.mulf %0, %1 : vector<8x1xf32>
    %c0_1 = arith.constant 0 : index
    %c0_2 = arith.constant 0 : index
    %3 = vector.load %arg3[%c0_1, %c0_2] : memref<8x1xf32, #tpu.memory_space<vmem>>, vector<8x1xf32>
    %cst_3 = arith.constant 1.562500e-02 : f32
    %4 = vector.broadcast %cst_3 : f32 to vector<8x1xf32>
    %5 = arith.mulf %3, %4 : vector<8x1xf32>
    %6 = arith.mulf %2, %2 : vector<8x1xf32>
    %7 = arith.subf %5, %6 : vector<8x1xf32>
    %c0_4 = arith.constant 0 : index
    %c0_5 = arith.constant 0 : index
    %8 = vector.load %arg4[%c0_4, %c0_5] : memref<8x1xf32, #tpu.memory_space<vmem>>, vector<8x1xf32>
    %cst_6 = arith.constant 9.99999974E-6 : f32
    %9 = vector.broadcast %cst_6 : f32 to vector<8x1xf32>
    %10 = arith.addf %7, %9 : vector<8x1xf32>
    %11 = math.rsqrt %10 : vector<8x1xf32>
    %12 = arith.mulf %8, %11 : vector<8x1xf32>
    %c0_7 = arith.constant 0 : index
    %c0_8 = arith.constant 0 : index
    %13 = vector.load %arg5[%c0_7, %c0_8] : memref<8x1xf32, #tpu.memory_space<vmem>>, vector<8x1xf32>
    %14 = arith.mulf %2, %12 : vector<8x1xf32>
    %15 = arith.subf %13, %14 : vector<8x1xf32>
    %c0_9 = arith.constant 0 : index
    %c0_10 = arith.constant 0 : index
    %16 = vector.load %arg1[%c0_9, %c0_10] : memref<8x64xf32, #tpu.memory_space<vmem>>, vector<8x64xf32>
    %17 = vector.broadcast %12 : vector<8x1xf32> to vector<8x64xf32>
    %18 = arith.mulf %16, %17 : vector<8x64xf32>
    %19 = vector.broadcast %15 : vector<8x1xf32> to vector<8x64xf32>
    %20 = arith.addf %18, %19 : vector<8x64xf32>
    %cst_11 = arith.constant 0.000000e+00 : f32
    %21 = vector.broadcast %cst_11 : f32 to vector<8x64xf32>
    %22 = arith.maximumf %20, %21 : vector<8x64xf32>
    %23 = arith.truncf %22 : vector<8x64xf32> to vector<8x64xbf16>
    %c0_12 = arith.constant 0 : index
    %c0_13 = arith.constant 0 : index
    %24 = vector.load %arg6[%c0_12, %c0_13] : memref<8x64xbf16, #tpu.memory_space<vmem>>, vector<8x64xbf16>
    tpu.vector_store %arg6[%c0_12, %c0_13], %23 {strides = array<i32>} : memref<8x64xbf16, #tpu.memory_space<vmem>>, vector<8x64xbf16>,
    return
  }
  func.func @transform_0(%arg0: i32) -> (i32, i32) {
    %c0_i32 = arith.constant 0 : i32
    %c0_i32_0 = arith.constant 0 : i32
    return %c0_i32, %arg0 : i32, i32
  }
  func.func @transform_1(%arg0: i32) -> (i32, i32) {
    %c0_i32 = arith.constant 0 : i32
    %c0_i32_0 = arith.constant 0 : i32
    %c0_i32_1 = arith.constant 0 : i32
    return %c0_i32, %c0_i32_0 : i32, i32
  }
  func.func @transform_2(%arg0: i32) -> (i32, i32) {
    %c0_i32 = arith.constant 0 : i32
    %c0_i32_0 = arith.constant 0 : i32
    %c0_i32_1 = arith.constant 0 : i32
    return %c0_i32, %c0_i32_0 : i32, i32
  }
  func.func @transform_3(%arg0: i32) -> (i32, i32) {
    %c0_i32 = arith.constant 0 : i32
    %c0_i32_0 = arith.constant 0 : i32
    %c0_i32_1 = arith.constant 0 : i32
    return %c0_i32, %c0_i32_0 : i32, i32
  }
  func.func @transform_4(%arg0: i32) -> (i32, i32) {
    %c0_i32 = arith.constant 0 : i32
    %c0_i32_0 = arith.constant 0 : i32
    %c0_i32_1 = arith.constant 0 : i32
    return %c0_i32, %c0_i32_0 : i32, i32
  }
  func.func @transform_5(%arg0: i32) -> (i32, i32) {
    %c0_i32 = arith.constant 0 : i32
    %c0_i32_0 = arith.constant 0 : i32
    return %c0_i32, %arg0 : i32, i32
  }
}

module attributes {stable_mosaic.version = 11 : i64} {
  func.func @mlp_head_kernel(%arg0: memref<128x4xbf16, #tpu.memory_space<vmem>>, %arg1: memref<8x128xbf16, #tpu.memory_space<vmem>>, %arg2: memref<8x1xf32, #tpu.memory_space<vmem>>, %arg3: memref<8x1xf32, #tpu.memory_space<vmem>>, %arg4: memref<8x1xf32, #tpu.memory_space<vmem>>, %arg5: memref<1x1xf32, #tpu.memory_space<vmem>>, %arg6: memref<1x4xf32, #tpu.memory_space<vmem>>) attributes {dimension_semantics = [], scalar_prefetch = 0 : i64, scratch_operands = 0 : i64, tpu.core_type = #tpu.core_type<tc>} {
    %c0 = arith.constant 0 : index
    %c0_0 = arith.constant 0 : index
    %0 = vector.load %arg1[%c0, %c0_0] : memref<8x128xbf16, #tpu.memory_space<vmem>>, vector<8x128xbf16>
    %c0_1 = arith.constant 0 : index
    %c0_2 = arith.constant 0 : index
    %1 = vector.load %arg0[%c0_1, %c0_2] : memref<128x4xbf16, #tpu.memory_space<vmem>>, vector<128x4xbf16>
    %cst = arith.constant dense<0.000000e+00> : vector<8x4xf32>
    %2 = tpu.matmul %0, %1, %cst {dimension_numbers = #tpu.dot_dimension_numbers<[1], [0], [0], [1], [0, 0, 1, 1], [], []>} : vector<8x128xbf16>, vector<128x4xbf16>, vector<8x4xf32> -> vector<8x4xf32>
    %cst_3 = arith.constant dense<0.000000e+00> : vector<8xf32>
    %3 = vector.multi_reduction <add>, %2, %cst_3 [1] : vector<8x4xf32> to vector<8xf32>
    %4 = vector.shape_cast %3 : vector<8xf32> to vector<8x1xf32>
    %cst_4 = arith.constant 4.000000e+00 : f32
    %5 = vector.broadcast %cst_4 : f32 to vector<8x1xf32>
    %6 = arith.divf %4, %5 : vector<8x1xf32>
    %7 = arith.mulf %2, %2 : vector<8x4xf32>
    %cst_5 = arith.constant dense<0.000000e+00> : vector<8xf32>
    %8 = vector.multi_reduction <add>, %7, %cst_5 [1] : vector<8x4xf32> to vector<8xf32>
    %9 = vector.shape_cast %8 : vector<8xf32> to vector<8x1xf32>
    %cst_6 = arith.constant 4.000000e+00 : f32
    %10 = vector.broadcast %cst_6 : f32 to vector<8x1xf32>
    %11 = arith.divf %9, %10 : vector<8x1xf32>
    %12 = arith.mulf %6, %6 : vector<8x1xf32>
    %13 = arith.subf %11, %12 : vector<8x1xf32>
    %c0_7 = arith.constant 0 : index
    %c0_8 = arith.constant 0 : index
    %14 = vector.load %arg2[%c0_7, %c0_8] : memref<8x1xf32, #tpu.memory_space<vmem>>, vector<8x1xf32>
    %cst_9 = arith.constant 9.99999974E-6 : f32
    %15 = vector.broadcast %cst_9 : f32 to vector<8x1xf32>
    %16 = arith.addf %13, %15 : vector<8x1xf32>
    %17 = math.rsqrt %16 : vector<8x1xf32>
    %18 = arith.mulf %14, %17 : vector<8x1xf32>
    %c0_10 = arith.constant 0 : index
    %c0_11 = arith.constant 0 : index
    %19 = vector.load %arg3[%c0_10, %c0_11] : memref<8x1xf32, #tpu.memory_space<vmem>>, vector<8x1xf32>
    %20 = arith.mulf %6, %18 : vector<8x1xf32>
    %21 = arith.subf %19, %20 : vector<8x1xf32>
    %22 = vector.broadcast %18 : vector<8x1xf32> to vector<8x4xf32>
    %23 = arith.mulf %2, %22 : vector<8x4xf32>
    %24 = vector.broadcast %21 : vector<8x1xf32> to vector<8x4xf32>
    %25 = arith.addf %23, %24 : vector<8x4xf32>
    %cst_12 = arith.constant 0.000000e+00 : f32
    %26 = vector.broadcast %cst_12 : f32 to vector<8x4xf32>
    %27 = arith.maximumf %25, %26 : vector<8x4xf32>
    %c0_13 = arith.constant 0 : index
    %c0_14 = arith.constant 0 : index
    %28 = vector.load %arg4[%c0_13, %c0_14] : memref<8x1xf32, #tpu.memory_space<vmem>>, vector<8x1xf32>
    %29 = vector.broadcast %28 : vector<8x1xf32> to vector<8x4xf32>
    %30 = arith.mulf %27, %29 : vector<8x4xf32>
    %cst_15 = arith.constant dense<0.000000e+00> : vector<4xf32>
    %31 = vector.multi_reduction <add>, %30, %cst_15 [0] : vector<8x4xf32> to vector<4xf32>
    %32 = vector.shape_cast %31 : vector<4xf32> to vector<1x4xf32>
    %c0_16 = arith.constant 0 : index
    %c0_17 = arith.constant 0 : index
    %33 = vector.load %arg5[%c0_16, %c0_17] : memref<1x1xf32, #tpu.memory_space<vmem>>, vector<1x1xf32>
    %34 = vector.broadcast %33 : vector<1x1xf32> to vector<1x4xf32>
    %35 = arith.addf %32, %34 : vector<1x4xf32>
    %36 = arith.negf %35 : vector<1x4xf32>
    %37 = math.exp %36 : vector<1x4xf32>
    %cst_18 = arith.constant 1.000000e+00 : f32
    %38 = vector.broadcast %cst_18 : f32 to vector<1x4xf32>
    %39 = arith.addf %38, %37 : vector<1x4xf32>
    %40 = arith.divf %38, %39 : vector<1x4xf32>
    %c0_19 = arith.constant 0 : index
    %c0_20 = arith.constant 0 : index
    %41 = vector.load %arg6[%c0_19, %c0_20] : memref<1x4xf32, #tpu.memory_space<vmem>>, vector<1x4xf32>
    tpu.vector_store %arg6[%c0_19, %c0_20], %40 {strides = array<i32>} : memref<1x4xf32, #tpu.memory_space<vmem>>, vector<1x4xf32>,
    return
  }
}

</mosaic_0001>

<llo_original>
// kernel: discriminator_forward.6
$region0: #{discriminator_forward.6}
  #allocation0 [shape = 'u32[]', space=smem, size = 0x4, offset = 0x4, fixed_abs, tag = 'smem constant byte address 0x4 - core index']
  #allocation1 [shape = 'u32[144,128]{1,0:T(1,128)}', space=vmem, size = 0x12000, scoped, tag = 'internal scratch']
  %s0 = inlined_call_operand.vmem [shape: f32[8,256], index: 0, kind: input, shape index: {}]
  %s1 = inlined_call_operand.vmem [shape: f32[8,1], index: 1, kind: input, shape index: {}]
  %s2 = inlined_call_operand.vmem [shape: f32[8,1], index: 2, kind: input, shape index: {}]
  %s3 = inlined_call_operand.vmem [shape: f32[8,1], index: 3, kind: input, shape index: {}]
  %s4 = inlined_call_operand.vmem [shape: f32[8,1], index: 4, kind: input, shape index: {}]
  %s5 = inlined_call_operand.vmem [shape: bf16[8,256], index: 5, kind: output, shape index: {}]
  %s6 = sld [smem:[#allocation0]]
  $region53: #{discriminator_forward.6} parent=0
    _
  %s8 = ssub.s32 1, %s6
  %s9 = scalar_select 0, %s8, %s6
  loop: start=0, step=1, limit=4
  $region2: #{discriminator_forward.6} parent=0 // loop_pre_header
    _
  $region3: #{discriminator_forward.6} parent=0 // loop_header
    %s11 = sphi 0, %s15
    %p12 = scmp.ge.s32.totalorder %s11, 4
    %s21 = sphi 0, %s23
    %s24 = sphi 0, %s21
    %s25 = sphi 0, %s24
    %s41 = sphi 0, %s25
    %s45 = sphi 0, %s45
    %s47 = sphi 0, %s45
    %s48 = sphi 0, %s47
    %s62 = sphi 0, %s48
    %s66 = sphi 0, %s66
    %s68 = sphi 0, %s66
    %s69 = sphi 0, %s68
    %s83 = sphi 0, %s69
    %s87 = sphi 0, %s87
    %s89 = sphi 0, %s87
    %s90 = sphi 0, %s89
    %s104 = sphi 0, %s90
    %s108 = sphi 0, %s108
    %s110 = sphi 0, %s108
    %s111 = sphi 0, %s110
    %s125 = sphi 0, %s111
    %s131 = sphi 0, %s133
    %s134 = sphi 0, %s131
    %s135 = sphi 0, %s134
    %s151 = sphi 0, %s135
  $region4: #{discriminator_forward.6} parent=0 // loop_header_branch
    %14 = sbr.rel (%p12) target = $region8
  $region5: #{discriminator_forward.6} parent=0 // loop_body
    %s16 = ssub.s32 %s11, 1
    %s17 = ssub.s32 %s11, 2
    %s18 = sadd.s32 %s11, 1
    %s19 = ssub.s32 %s11, %s18
    %p20 = scmp.eq.s32.totalorder %s19, 0
    %s22 = sadd.s32 %s21, 1
    %s23 = scalar_select %p20, %s21, %s22
    %p26 = pneg %p20
    %p27 = scmp.eq.s32.totalorder %s11, 1
    %p28 = por %p26, %p27
    %p29 = scmp.ne.s32.totalorder %s21, %s24
    %p30 = scmp.eq.s32.totalorder %s11, 0
    %p31 = por %p29, %p30
    %p32 = scmp.ne.s32.totalorder %s21, %s24
    %p33 = scmp.eq.s32.totalorder %s16, 1
    %p34 = por %p32, %p33
    %p35 = scmp.ne.s32.totalorder %s24, %s25
    %p36 = scmp.eq.s32.totalorder %s16, 0
    %p37 = por %p35, %p36
    %p38 = scmp.ne.s32.totalorder %s24, %s25
    %p39 = scmp.eq.s32.totalorder %s17, 1
    %p40 = por %p38, %p39
    %p42 = scmp.ne.s32.totalorder %s25, %s41
    %p43 = scmp.eq.s32.totalorder %s17, 0
    %p44 = por %p42, %p43
    %s46 = sadd.s32 %s45, 1
    %p49 = scmp.eq.s32.totalorder %s11, 1
    %p50 = scmp.ne.s32.totalorder %s45, %s47
    %p51 = scmp.eq.s32.totalorder %s11, 0
    %p52 = por %p50, %p51
    %p53 = scmp.ne.s32.totalorder %s45, %s47
    %p54 = scmp.eq.s32.totalorder %s16, 1
    %p55 = por %p53, %p54
    %p56 = scmp.ne.s32.totalorder %s47, %s48
    %p57 = scmp.eq.s32.totalorder %s16, 0
    %p58 = por %p56, %p57
    %p59 = scmp.ne.s32.totalorder %s47, %s48
    %p60 = scmp.eq.s32.totalorder %s17, 1
    %p61 = por %p59, %p60
    %p63 = scmp.ne.s32.totalorder %s48, %s62
    %p64 = scmp.eq.s32.totalorder %s17, 0
    %p65 = por %p63, %p64
    %s67 = sadd.s32 %s66, 1
    %p70 = scmp.eq.s32.totalorder %s11, 1
    %p71 = scmp.ne.s32.totalorder %s66, %s68
    %p72 = scmp.eq.s32.totalorder %s11, 0
    %p73 = por %p71, %p72
    %p74 = scmp.ne.s32.totalorder %s66, %s68
    %p75 = scmp.eq.s32.totalorder %s16, 1
    %p76 = por %p74, %p75
    %p77 = scmp.ne.s32.totalorder %s68, %s69
    %p78 = scmp.eq.s32.totalorder %s16, 0
    %p79 = por %p77, %p78
    %p80 = scmp.ne.s32.totalorder %s68, %s69
    %p81 = scmp.eq.s32.totalorder %s17, 1
    %p82 = por %p80, %p81
    %p84 = scmp.ne.s32.totalorder %s69, %s83
    %p85 = scmp.eq.s32.totalorder %s17, 0
    %p86 = por %p84, %p85
    %s88 = sadd.s32 %s87, 1
    %p91 = scmp.eq.s32.totalorder %s11, 1
    %p92 = scmp.ne.s32.totalorder %s87, %s89
    %p93 = scmp.eq.s32.totalorder %s11, 0
    %p94 = por %p92, %p93
    %p95 = scmp.ne.s32.totalorder %s87, %s89
    %p96 = scmp.eq.s32.totalorder %s16, 1
    %p97 = por %p95, %p96
    %p98 = scmp.ne.s32.totalorder %s89, %s90
    %p99 = scmp.eq.s32.totalorder %s16, 0
    %p100 = por %p98, %p99
    %p101 = scmp.ne.s32.totalorder %s89, %s90
    %p102 = scmp.eq.s32.totalorder %s17, 1
    %p103 = por %p101, %p102
    %p105 = scmp.ne.s32.totalorder %s90, %s104
    %p106 = scmp.eq.s32.totalorder %s17, 0
    %p107 = por %p105, %p106
    %s109 = sadd.s32 %s108, 1
    %p112 = scmp.eq.s32.totalorder %s11, 1
    %p113 = scmp.ne.s32.totalorder %s108, %s110
    %p114 = scmp.eq.s32.totalorder %s11, 0
    %p115 = por %p113, %p114
    %p116 = scmp.ne.s32.totalorder %s108, %s110
    %p117 = scmp.eq.s32.totalorder %s16, 1
    %p118 = por %p116, %p117
    %p119 = scmp.ne.s32.totalorder %s110, %s111
    %p120 = scmp.eq.s32.totalorder %s16, 0
    %p121 = por %p119, %p120
    %p122 = scmp.ne.s32.totalorder %s110, %s111
    %p123 = scmp.eq.s32.totalorder %s17, 1
    %p124 = por %p122, %p123
    %p126 = scmp.ne.s32.totalorder %s111, %s125
    %p127 = scmp.eq.s32.totalorder %s17, 0
    %p128 = por %p126, %p127
    %s129 = ssub.s32 %s11, %s18
    %p130 = scmp.eq.s32.totalorder %s129, 0
    %s132 = sadd.s32 %s131, 1
    %s133 = scalar_select %p130, %s131, %s132
    %p136 = pneg %p130
    %p137 = scmp.eq.s32.totalorder %s11, 1
    %p138 = por %p136, %p137
    %p139 = scmp.ne.s32.totalorder %s131, %s134
    %p140 = scmp.eq.s32.totalorder %s11, 0
    %p141 = por %p139, %p140
    %p142 = scmp.ne.s32.totalorder %s131, %s134
    %p143 = scmp.eq.s32.totalorder %s16, 1
    %p144 = por %p142, %p143
    %p145 = scmp.ne.s32.totalorder %s134, %s135
    %p146 = scmp.eq.s32.totalorder %s16, 0
    %p147 = por %p145, %p146
    %p148 = scmp.ne.s32.totalorder %s134, %s135
    %p149 = scmp.eq.s32.totalorder %s17, 1
    %p150 = por %p148, %p149
    %p152 = scmp.ne.s32.totalorder %s135, %s151
    %p153 = scmp.eq.s32.totalorder %s17, 0
    %p154 = por %p152, %p153
    %p155 = scmp.le.s32.totalorder 1, %s11
    %p156 = scmp.lt.s32.totalorder %s11, 3
    %p157 = pnand %p155, %p156
    %p158 = pneg %p157
    // Predicated region
    $region9: #{discriminator_forward.6} parent=5 // pred_check
      _
    $region10: #{discriminator_forward.6} parent=5 // pred_check_branch
      %160 = sbr.rel (%p157) target = $region12
    $region11: #{discriminator_forward.6} parent=5 // pred_region
      %s161 = ssub.s32 %s11, 1
      // Predicated region
      $region13: #{discriminator_forward.6} parent=11 // pred_check
        %p162 = pneg %p58
      $region14: #{discriminator_forward.6} parent=11 // pred_check_branch
        %164 = sbr.rel (%p162) target = $region16
      $region15: #{discriminator_forward.6} parent=11 // pred_region
        _
      $region16: #{discriminator_forward.6} parent=11 // pred_fallthru
        _
      // Predicated region
      $region17: #{discriminator_forward.6} parent=11 // pred_check
        %p165 = pneg %p79
      $region18: #{discriminator_forward.6} parent=11 // pred_check_branch
        %167 = sbr.rel (%p165) target = $region20
      $region19: #{discriminator_forward.6} parent=11 // pred_region
        _
      $region20: #{discriminator_forward.6} parent=11 // pred_fallthru
        _
      // Predicated region
      $region21: #{discriminator_forward.6} parent=11 // pred_check
        %p168 = pneg %p100
      $region22: #{discriminator_forward.6} parent=11 // pred_check_branch
        %170 = sbr.rel (%p168) target = $region24
      $region23: #{discriminator_forward.6} parent=11 // pred_region
        _
      $region24: #{discriminator_forward.6} parent=11 // pred_fallthru
        _
      // Predicated region
      $region25: #{discriminator_forward.6} parent=11 // pred_check
        %p171 = pneg %p121
      $region26: #{discriminator_forward.6} parent=11 // pred_check_branch
        %173 = sbr.rel (%p171) target = $region28
      $region27: #{discriminator_forward.6} parent=11 // pred_region
        _
      $region28: #{discriminator_forward.6} parent=11 // pred_fallthru
        _
    $region12: #{discriminator_forward.6} parent=5 // pred_fallthru
      _
    %p174 = scmp.lt.s32.totalorder %s11, 2
    // Predicated region
    $region29: #{discriminator_forward.6} parent=5 // pred_check
      %p175 = pneg %p174
    $region30: #{discriminator_forward.6} parent=5 // pred_check_branch
      %177 = sbr.rel (%p175) target = $region32
    $region31: #{discriminator_forward.6} parent=5 // pred_region
      // Predicated region
      $region33: #{discriminator_forward.6} parent=31 // pred_check
        %p178 = pneg %p31
      $region34: #{discriminator_forward.6} parent=31 // pred_check_branch
        %180 = sbr.rel (%p178) target = $region36
      $region35: #{discriminator_forward.6} parent=31 // pred_region
        %p181 = scmp.lt.s32.totalorder %s11, 1
        %s182 = scalar_select %p181, %s11, 1
        %s183 = smul.addr %s182, 8
        %s184 = scalar_lea.vmem %s0, %s183
      $region36: #{discriminator_forward.6} parent=31 // pred_fallthru
        _
    $region32: #{discriminator_forward.6} parent=5 // pred_fallthru
      _
    %p185 = scmp.le.s32.totalorder 1, %s11
    %p186 = scmp.lt.s32.totalorder %s11, 3
    %p187 = pnand %p185, %p186
    %p188 = pneg %p187
    // Predicated region
    $region37: #{discriminator_forward.6} parent=5 // pred_check
      _
    $region38: #{discriminator_forward.6} parent=5 // pred_check_branch
      %190 = sbr.rel (%p187) target = $region40
    $region39: #{discriminator_forward.6} parent=5 // pred_region
      %s191 = ssub.s32 %s11, 1
      %p192 = scmp.lt.s32.totalorder %s16, 1
      %s193 = scalar_select %p192, %s16, 1
      %s194 = smul.addr %s193, 8
      %s195 = scalar_lea.vmem %s0, %s194
      %p196 = pneg %p37
      %p197 = pneg %p34
      %p198 = pneg %p58
      %p199 = pneg %p55
      %p200 = pneg %p79
      %p201 = pneg %p76
      %p202 = pneg %p100
      %p203 = pneg %p97
      %p204 = pneg %p121
      %p205 = pneg %p118
      %p206 = pneg %p147
      %p207 = pneg %p144
      %p208 = scmp.lt.s32.totalorder %s16, 1
      %s209 = scalar_select %p208, %s16, 1
      %s210 = smul.addr %s209, 4
      %s211 = scalar_lea.vmem %s5, %s210
      %p212 = scmp.lt.s32.totalorder %s16, 1
      %s213 = scalar_select %p212, %s16, 1
      %s214 = smul.addr %s213, 8
      %s215 = scalar_lea.vmem %s0, %s214
      %p216 = scmp.lt.s32.totalorder %s16, 1
      %s217 = scalar_select %p216, %s16, 1
      %s218 = smul.addr %s217, 4
      %s219 = scalar_lea.vmem %s5, %s218
      %v220 = vld [vmem:[%s1] sm:$0xff]
      %v221 = vmul.f32 %v220, 0.00390625
      %v222 = vld [vmem:[%s2] sm:$0xff]
      %v223 = vmul.f32 %v222, 0.00390625
      %v224 = vmul.f32 %v221, %v221
      %v225 = vsub.f32 %v223, %v224
      %v226 = vld [vmem:[%s3] sm:$0xff]
      %v227 = vadd.f32 %v225, 1e-05
      %v228 = vrsqrt.pop %v227
      %v229 = vmul.f32 %v226, %v228
      %v230 = vld [vmem:[%s4] sm:$0xff]
      %v231 = vmul.f32 %v221, %v229
      %v232 = vsub.f32 %v230, %v231
      %v233 = vld [vmem:[%s215] sm:$0xff]
      %235 = vset.pattern.permute.xlu0 0
      %236 = vperm.xlu0 %235, %v229
      %v237 = vpop.permute.xlu0 %236
      %v239 = vmul.f32 %v233, %v237
      %241 = vset.pattern.permute.xlu0 0
      %242 = vperm.xlu0 %241, %v232
      %v243 = vpop.permute.xlu0 %242
      %v245 = vadd.f32 %v239, %v243
      %v246 = vmax.f32 %v245, 0.0
      %v247 = vpack.c.bf16 %v246, %v246
      %248 = vst [vmem:[%s219] sm:$0xf] %v247
      %p249 = scmp.lt.s32.totalorder %s16, 1
      %s250 = scalar_select %p249, %s16, 1
      %s251 = smul.addr %s250, 4
      %s252 = scalar_lea.vmem %s5, %s251
      // Predicated region
      $region41: #{discriminator_forward.6} parent=39 // pred_check
        %p253 = pneg %p144
      $region42: #{discriminator_forward.6} parent=39 // pred_check_branch
        %255 = sbr.rel (%p253) target = $region44
      $region43: #{discriminator_forward.6} parent=39 // pred_region
        _
      $region44: #{discriminator_forward.6} parent=39 // pred_fallthru
        _
    $region40: #{discriminator_forward.6} parent=5 // pred_fallthru
      _
    %p256 = scmp.le.s32.totalorder 2, %s11
    // Predicated region
    $region45: #{discriminator_forward.6} parent=5 // pred_check
      %p257 = pneg %p256
    $region46: #{discriminator_forward.6} parent=5 // pred_check_branch
      %259 = sbr.rel (%p257) target = $region48
    $region47: #{discriminator_forward.6} parent=5 // pred_region
      %s260 = ssub.s32 %s11, 2
      // Predicated region
      $region49: #{discriminator_forward.6} parent=47 // pred_check
        %p261 = pneg %p150
      $region50: #{discriminator_forward.6} parent=47 // pred_check_branch
        %263 = sbr.rel (%p261) target = $region52
      $region51: #{discriminator_forward.6} parent=47 // pred_region
        %p264 = scmp.lt.s32.totalorder %s17, 1
        %s265 = scalar_select %p264, %s17, 1
        %s266 = smul.addr %s265, 4
        %s267 = scalar_lea.vmem %s5, %s266
      $region52: #{discriminator_forward.6} parent=47 // pred_fallthru
        _
    $region48: #{discriminator_forward.6} parent=5 // pred_fallthru
      _
  $region6: #{discriminator_forward.6} parent=0 // loop_footer
    %s15 = sadd.s32 1, %s11
  $region7: #{discriminator_forward.6} parent=0 // loop_footer_branch
    %10 = sbr.rel target = $region3
  $region8: #{discriminator_forward.6} parent=0 // loop_exit
    _

// kernel: discriminator_forward.5
$region0: #{discriminator_forward.5}
  #allocation0 [shape = 'u32[]', space=smem, size = 0x4, offset = 0x4, fixed_abs, tag = 'smem constant byte address 0x4 - core index']
  #allocation1 [shape = 'u32[144,128]{1,0:T(1,128)}', space=vmem, size = 0x12000, scoped, tag = 'internal scratch']
  %s0 = inlined_call_operand.vmem [shape: bf16[8,16], index: 0, kind: input, shape index: {}]
  %s1 = inlined_call_operand.vmem [shape: bf16[16,256], index: 1, kind: input, shape index: {}]
  %s2 = inlined_call_operand.vmem [shape: f32[8,256], index: 2, kind: output, shape index: {0}]
  %s3 = inlined_call_operand.vmem [shape: f32[8,1], index: 3, kind: output, shape index: {1}]
  %s4 = inlined_call_operand.vmem [shape: f32[8,1], index: 4, kind: output, shape index: {2}]
  %5 = xla_tuple %s2, %s3, %s4
  %s6 = sld [smem:[#allocation0]]
  $region106: #{discriminator_forward.5} parent=0
    _
  %s8 = ssub.s32 1, %s6
  %s9 = scalar_select 0, %s8, %s6
  $region1: #{discriminator_forward.5} parent=0
    #allocation2 [shape = 'u8[8192]{0}', space=vmem, size = 0x2000, scoped, tag = 'input window, operand 1']
    loop: start=0, step=1, limit=4
    $region2: #{discriminator_forward.5} parent=1 // loop_pre_header
      _
    $region3: #{discriminator_forward.5} parent=1 // loop_header
      %s11 = sphi 0, %s15
      %p12 = scmp.ge.s32.totalorder %s11, 4
      %s19 = sphi 0, %s19
      %s21 = sphi 0, %s19
      %s22 = sphi 0, %s21
      %s36 = sphi 0, %s22
      %s42 = sphi 0, %s44
      %s45 = sphi 0, %s42
      %s46 = sphi 0, %s45
      %s62 = sphi 0, %s46
      %s68 = sphi 0, %s70
      %s71 = sphi 0, %s68
      %s72 = sphi 0, %s71
      %s88 = sphi 0, %s72
      %s92 = sphi 0, %s92
      %s94 = sphi 0, %s92
      %s95 = sphi 0, %s94
      %s109 = sphi 0, %s95
      %s113 = sphi 0, %s113
      %s115 = sphi 0, %s113
      %s116 = sphi 0, %s115
      %s130 = sphi 0, %s116
    $region4: #{discriminator_forward.5} parent=1 // loop_header_branch
      %14 = sbr.rel (%p12) target = $region8
    $region5: #{discriminator_forward.5} parent=1 // loop_body
      %s16 = ssub.s32 %s11, 1
      %s17 = ssub.s32 %s11, 2
      %s18 = sadd.s32 %s11, 1
      %s20 = sadd.s32 %s19, 1
      %p23 = scmp.eq.s32.totalorder %s11, 1
      %p24 = scmp.ne.s32.totalorder %s19, %s21
      %p25 = scmp.eq.s32.totalorder %s11, 0
      %p26 = por %p24, %p25
      %p27 = scmp.ne.s32.totalorder %s19, %s21
      %p28 = scmp.eq.s32.totalorder %s16, 1
      %p29 = por %p27, %p28
      %p30 = scmp.ne.s32.totalorder %s21, %s22
      %p31 = scmp.eq.s32.totalorder %s16, 0
      %p32 = por %p30, %p31
      %p33 = scmp.ne.s32.totalorder %s21, %s22
      %p34 = scmp.eq.s32.totalorder %s17, 1
      %p35 = por %p33, %p34
      %p37 = scmp.ne.s32.totalorder %s22, %s36
      %p38 = scmp.eq.s32.totalorder %s17, 0
      %p39 = por %p37, %p38
      %s40 = ssub.s32 %s11, %s18
      %p41 = scmp.eq.s32.totalorder %s40, 0
      %s43 = sadd.s32 %s42, 1
      %s44 = scalar_select %p41, %s42, %s43
      %p47 = pneg %p41
      %p48 = scmp.eq.s32.totalorder %s11, 1
      %p49 = por %p47, %p48
      %p50 = scmp.ne.s32.totalorder %s42, %s45
      %p51 = scmp.eq.s32.totalorder %s11, 0
      %p52 = por %p50, %p51
      %p53 = scmp.ne.s32.totalorder %s42, %s45
      %p54 = scmp.eq.s32.totalorder %s16, 1
      %p55 = por %p53, %p54
      %p56 = scmp.ne.s32.totalorder %s45, %s46
      %p57 = scmp.eq.s32.totalorder %s16, 0
      %p58 = por %p56, %p57
      %p59 = scmp.ne.s32.totalorder %s45, %s46
      %p60 = scmp.eq.s32.totalorder %s17, 1
      %p61 = por %p59, %p60
      %p63 = scmp.ne.s32.totalorder %s46, %s62
      %p64 = scmp.eq.s32.totalorder %s17, 0
      %p65 = por %p63, %p64
      %s66 = ssub.s32 %s11, %s18
      %p67 = scmp.eq.s32.totalorder %s66, 0
      %s69 = sadd.s32 %s68, 1
      %s70 = scalar_select %p67, %s68, %s69
      %p73 = pneg %p67
      %p74 = scmp.eq.s32.totalorder %s11, 1
      %p75 = por %p73, %p74
      %p76 = scmp.ne.s32.totalorder %s68, %s71
      %p77 = scmp.eq.s32.totalorder %s11, 0
      %p78 = por %p76, %p77
      %p79 = scmp.ne.s32.totalorder %s68, %s71
      %p80 = scmp.eq.s32.totalorder %s16, 1
      %p81 = por %p79, %p80
      %p82 = scmp.ne.s32.totalorder %s71, %s72
      %p83 = scmp.eq.s32.totalorder %s16, 0
      %p84 = por %p82, %p83
      %p85 = scmp.ne.s32.totalorder %s71, %s72
      %p86 = scmp.eq.s32.totalorder %s17, 1
      %p87 = por %p85, %p86
      %p89 = scmp.ne.s32.totalorder %s72, %s88
      %p90 = scmp.eq.s32.totalorder %s17, 0
      %p91 = por %p89, %p90
      %s93 = sadd.s32 %s92, 1
      %p96 = scmp.eq.s32.totalorder %s11, 1
      %p97 = scmp.ne.s32.totalorder %s92, %s94
      %p98 = scmp.eq.s32.totalorder %s11, 0
      %p99 = por %p97, %p98
      %p100 = scmp.ne.s32.totalorder %s92, %s94
      %p101 = scmp.eq.s32.totalorder %s16, 1
      %p102 = por %p100, %p101
      %p103 = scmp.ne.s32.totalorder %s94, %s95
      %p104 = scmp.eq.s32.totalorder %s16, 0
      %p105 = por %p103, %p104
      %p106 = scmp.ne.s32.totalorder %s94, %s95
      %p107 = scmp.eq.s32.totalorder %s17, 1
      %p108 = por %p106, %p107
      %p110 = scmp.ne.s32.totalorder %s95, %s109
      %p111 = scmp.eq.s32.totalorder %s17, 0
      %p112 = por %p110, %p111
      %s114 = sadd.s32 %s113, 1
      %p117 = scmp.eq.s32.totalorder %s11, 1
      %p118 = scmp.ne.s32.totalorder %s113, %s115
      %p119 = scmp.eq.s32.totalorder %s11, 0
      %p120 = por %p118, %p119
      %p121 = scmp.ne.s32.totalorder %s113, %s115
      %p122 = scmp.eq.s32.totalorder %s16, 1
      %p123 = por %p121, %p122
      %p124 = scmp.ne.s32.totalorder %s115, %s116
      %p125 = scmp.eq.s32.totalorder %s16, 0
      %p126 = por %p124, %p125
      %p127 = scmp.ne.s32.totalorder %s115, %s116
      %p128 = scmp.eq.s32.totalorder %s17, 1
      %p129 = por %p127, %p128
      %p131 = scmp.ne.s32.totalorder %s116, %s130
      %p132 = scmp.eq.s32.totalorder %s17, 0
      %p133 = por %p131, %p132
      %p134 = scmp.le.s32.totalorder 1, %s11
      %p135 = scmp.lt.s32.totalorder %s11, 3
      %p136 = pnand %p134, %p135
      %p137 = pneg %p136
      // Predicated region
      $region9: #{discriminator_forward.5} parent=5 // pred_check
        _
      $region10: #{discriminator_forward.5} parent=5 // pred_check_branch
        %139 = sbr.rel (%p136) target = $region12
      $region11: #{discriminator_forward.5} parent=5 // pred_region
        %s140 = ssub.s32 %s11, 1
        // Predicated region
        $region13: #{discriminator_forward.5} parent=11 // pred_check
          %p141 = pneg %p32
        $region14: #{discriminator_forward.5} parent=11 // pred_check_branch
          %143 = sbr.rel (%p141) target = $region16
        $region15: #{discriminator_forward.5} parent=11 // pred_region
          _
        $region16: #{discriminator_forward.5} parent=11 // pred_fallthru
          _
      $region12: #{discriminator_forward.5} parent=5 // pred_fallthru
        _
      %p144 = scmp.lt.s32.totalorder %s11, 2
      // Predicated region
      $region17: #{discriminator_forward.5} parent=5 // pred_check
        %p145 = pneg %p144
      $region18: #{discriminator_forward.5} parent=5 // pred_check_branch
        %147 = sbr.rel (%p145) target = $region20
      $region19: #{discriminator_forward.5} parent=5 // pred_region
        // Predicated region
        $region21: #{discriminator_forward.5} parent=19 // pred_check
          %p148 = pneg %p52
        $region22: #{discriminator_forward.5} parent=19 // pred_check_branch
          %150 = sbr.rel (%p148) target = $region24
        $region23: #{discriminator_forward.5} parent=19 // pred_region
          %s151 = sand.u32 %s42, 1
          %s152 = sand.u32 %s42, 1
          %s153 = smul.addr %s152, 8
          %s154 = scalar_lea.vmem [#allocation2], %s153
          %s155 = smul.addr %s11, 4
          %s156 = scalar_lea.vmem %s1, %s155
          // Predicated region
          $region25: #{discriminator_forward.5} parent=23 // pred_check
            _
          $region26: #{discriminator_forward.5} parent=23 // pred_check_branch
            %158 = sbr.rel (0) target = $region28
          $region27: #{discriminator_forward.5} parent=23 // pred_region
            // Predicated region
            $region29: #{discriminator_forward.5} parent=27 // pred_check
              _
            $region30: #{discriminator_forward.5} parent=27 // pred_check_branch
              %160 = sbr.rel target = $region32
            $region31: #{discriminator_forward.5} parent=27 // pred_region
              // Predicated region
              $region44: #{discriminator_forward.5} parent=31 // pred_check
                _
              $region45: #{discriminator_forward.5} parent=31 // pred_check_branch
                %178 = sbr.rel (0) target = $region47
              $region46: #{discriminator_forward.5} parent=31 // pred_region
                loop: start=0, step=1, limit=1
                $region48: #{discriminator_forward.5} parent=46 // loop_pre_header
                  _
                $region49: #{discriminator_forward.5} parent=46 // loop_header
                  %s180 = sphi 0, %s184
                  %p181 = scmp.ge.s32.totalorder %s180, 1
                  %s185 = sphi %s156, %s156
                  %s186 = sphi %s154, %s154
                $region50: #{discriminator_forward.5} parent=46 // loop_header_branch
                  %183 = sbr.rel (%p181) target = $region54
                $region51: #{discriminator_forward.5} parent=46 // loop_body
                  _
                $region52: #{discriminator_forward.5} parent=46 // loop_footer
                  %s184 = sadd.s32 1, %s180
                $region53: #{discriminator_forward.5} parent=46 // loop_footer_branch
                  %179 = sbr.rel target = $region49
                $region54: #{discriminator_forward.5} parent=46 // loop_exit
                  _
                %s188 = ssub.s32 16, 1
                loop: start=0, step=1, limit=1
                $region55: #{discriminator_forward.5} parent=46 // loop_pre_header
                  _
                $region56: #{discriminator_forward.5} parent=46 // loop_header
                  %s190 = sphi 0, %s194
                  %p191 = scmp.ge.s32.totalorder %s190, 1
                  %s195 = sphi %s156, %s156
                  %s196 = sphi %s154, %s154
                $region57: #{discriminator_forward.5} parent=46 // loop_header_branch
                  %193 = sbr.rel (%p191) target = $region61
                $region58: #{discriminator_forward.5} parent=46 // loop_body
                  %v197 = vld [vmem:[%s195] sm:%s188]
                  %198 = vst [vmem:[%s196] sm:%s188] %v197
                  %v199 = vld [vmem:[%s195 + $0x8] sm:%s188]
                  %200 = vst [vmem:[%s196 + $0x4] sm:%s188] %v199
                $region59: #{discriminator_forward.5} parent=46 // loop_footer
                  %s194 = sadd.s32 1, %s190
                $region60: #{discriminator_forward.5} parent=46 // loop_footer_branch
                  %189 = sbr.rel target = $region56
                $region61: #{discriminator_forward.5} parent=46 // loop_exit
                  _
              $region47: #{discriminator_forward.5} parent=31 // pred_fallthru
                _
            $region32: #{discriminator_forward.5} parent=27 // pred_fallthru
              _
            // Predicated region
            $region33: #{discriminator_forward.5} parent=27 // pred_check
              _
            $region34: #{discriminator_forward.5} parent=27 // pred_check_branch
              %162 = sbr.rel (0) target = $region36
            $region35: #{discriminator_forward.5} parent=27 // pred_region
              %s164 = ssub.s32 16, 1
              loop: start=0, step=1, limit=1
              $region37: #{discriminator_forward.5} parent=35 // loop_pre_header
                _
              $region38: #{discriminator_forward.5} parent=35 // loop_header
                %s166 = sphi 0, %s170
                %p167 = scmp.ge.s32.totalorder %s166, 1
                %s171 = sphi %s156, %s156
                %s172 = sphi %s154, %s154
              $region39: #{discriminator_forward.5} parent=35 // loop_header_branch
                %169 = sbr.rel (%p167) target = $region43
              $region40: #{discriminator_forward.5} parent=35 // loop_body
                %v173 = vld [vmem:[%s171] sm:%s164]
                %174 = vst [vmem:[%s172] sm:%s164] %v173
                %v175 = vld [vmem:[%s171 + $0x8] sm:%s164]
                %176 = vst [vmem:[%s172 + $0x4] sm:%s164] %v175
              $region41: #{discriminator_forward.5} parent=35 // loop_footer
                %s170 = sadd.s32 1, %s166
              $region42: #{discriminator_forward.5} parent=35 // loop_footer_branch
                %165 = sbr.rel target = $region38
              $region43: #{discriminator_forward.5} parent=35 // loop_exit
                _
            $region36: #{discriminator_forward.5} parent=27 // pred_fallthru
              _
          $region28: #{discriminator_forward.5} parent=23 // pred_fallthru
            _
          %201 = vnop
        $region24: #{discriminator_forward.5} parent=19 // pred_fallthru
          _
      $region20: #{discriminator_forward.5} parent=5 // pred_fallthru
        _
      %p202 = scmp.le.s32.totalorder 1, %s11
      %p203 = scmp.lt.s32.totalorder %s11, 3
      %p204 = pnand %p202, %p203
      %p205 = pneg %p204
      // Predicated region
      $region62: #{discriminator_forward.5} parent=5 // pred_check
        _
      $region63: #{discriminator_forward.5} parent=5 // pred_check_branch
        %207 = sbr.rel (%p204) target = $region65
      $region64: #{discriminator_forward.5} parent=5 // pred_region
        %s208 = ssub.s32 %s11, 1
        %s209 = sand.u32 %s45, 1
        %s210 = sand.u32 %s45, 1
        %s211 = smul.addr %s210, 8
        %s212 = scalar_lea.vmem [#allocation2], %s211
        // Predicated region
        $region66: #{discriminator_forward.5} parent=64 // pred_check
          %p213 = pneg %p58
        $region67: #{discriminator_forward.5} parent=64 // pred_check_branch
          %215 = sbr.rel (%p213) target = $region69
        $region68: #{discriminator_forward.5} parent=64 // pred_region
          _
        $region69: #{discriminator_forward.5} parent=64 // pred_fallthru
          _
        %p216 = pneg %p32
        %p217 = pneg %p29
        %s218 = sand.u32 %s45, 1
        %s219 = sand.u32 %s45, 1
        %s220 = smul.addr %s219, 8
        %s221 = scalar_lea.vmem [#allocation2], %s220
        %p222 = pneg %p58
        %p223 = pneg %p55
        %p224 = pneg %p84
        %p225 = pneg %p81
        %p226 = scmp.lt.s32.totalorder %s16, 1
        %s227 = scalar_select %p226, %s16, 1
        %s228 = smul.addr %s227, 8
        %s229 = scalar_lea.vmem %s2, %s228
        %p230 = pneg %p105
        %p231 = pneg %p102
        %p232 = pneg %p126
        %p233 = pneg %p123
        %p234 = scmp.lt.s32.totalorder %s16, 1
        %s235 = scalar_select %p234, %s16, 1
        %s236 = smul.addr %s235, 8
        %s237 = scalar_lea.vmem %s2, %s236
        %v239 = vld [vmem:[%s0] sm:$0xf]
        %v240 = vld [vmem:[%s212] sm:$0xf]
        %v241 = vld [vmem:[%s212 + $0x4] sm:$0xf]
        %v244 = vunpack.c.l.b16 %v240
        %v245 = vunpack.c.l.b16 %v241
        %v246 = vpack.c.b16 %v245, %v244
        %vm248 = vcmask 130048
        %v250 = vsel %vm248, %v239, 0
        %252 = vmatprep.subr.bf16.mxu0 0
        %253 = vmatpush1.bf16.msra.mxu0 0
        %254 = vmatprep.subr.bf16.mxu0 0
        %255 = vmatpush1.bf16.msra.mxu0 0
        %256 = vmatprep.subr.bf16.mxu0 0
        %257 = vmatpush1.bf16.msra.mxu0 0
        %258 = vmatprep.subr.bf16.mxu0 0
        %259 = vmatpush1.bf16.msra.mxu0 0
        %260 = vmatprep.subr.bf16.mxu0 0
        %261 = vmatpush1.bf16.msra.mxu0 0
        %262 = vmatprep.subr.bf16.mxu0 0
        %263 = vmatpush1.bf16.msra.mxu0 0
        %264 = vmatprep.subr.bf16.mxu0 0
        %265 = vmatpush1.bf16.msra.mxu0 0
        %266 = vmatprep.subr.bf16.mxu0 0
        %267 = vmatpush1.bf16.msra.mxu0 %v246
        %268 = vmatprep.subr.bf16.mxu0 0
        %269 = vmatpush2.bf16.msra.mxu0 0
        %270 = vmatprep.subr.bf16.mxu0 0
        %271 = vmatpush2.bf16.msra.mxu0 0
        %272 = vmatprep.subr.bf16.mxu0 0
        %273 = vmatpush2.bf16.msra.mxu0 0
        %274 = vmatprep.subr.bf16.mxu0 0
        %275 = vmatpush2.bf16.msra.mxu0 0
        %276 = vmatprep.subr.bf16.mxu0 0
        %277 = vmatpush2.bf16.msra.mxu0 0
        %278 = vmatprep.subr.bf16.mxu0 0
        %279 = vmatpush2.bf16.msra.mxu0 0
        %280 = vmatprep.subr.bf16.mxu0 0
        %281 = vmatpush2.bf16.msra.mxu0 0
        %282 = vmatprep.subr.bf16.mxu0 0
        %283 = vmatpush2.bf16.msra.mxu0 0
        %284 = vmatprep.mubr.bf16.mxu0 0
        %285 = vmatmul.mubr.bf16.gmra.mxu0 %v250
        %v286 = vpop.f32.mrf.mxu0
        %v287 = vadd.f32 0.0, %v286
        %v288 = vpop.f32.mrf.mxu0
        %v289 = vpop.f32.mrf.mxu0
        %v290 = vpop.f32.mrf.mxu0
        %291 = vdwg.mxu0
        %292 = vst [vmem:[%s237] sm:$0xff] %v287
        %293 = vadd.xlane.f32.xlu0 %v287
        %v294 = vpop.xlane.xlu0 %293
        %v295 = vmul.f32 %v287, %v287
        %296 = vadd.xlane.f32.xlu0 %v295
        %v297 = vpop.xlane.xlu0 %296
        %p298 = scmp.eq.s32.totalorder %s16, 0
        // Predicated region
        $region70: #{discriminator_forward.5} parent=64 // pred_check
          %p299 = pneg %p298
        $region71: #{discriminator_forward.5} parent=64 // pred_check_branch
          %301 = sbr.rel (%p299) target = $region73
        $region72: #{discriminator_forward.5} parent=64 // pred_region
          %vm302 = vcmask 7168
          %303 = vst.msk [vmem:[%s3] sm:$0xff] %vm302, %v294
          %304 = vst.msk [vmem:[%s4] sm:$0xff] %vm302, %v297
        $region73: #{discriminator_forward.5} parent=64 // pred_fallthru
          _
        %p305 = scmp.ne.s32.totalorder %s16, 0
        // Predicated region
        $region74: #{discriminator_forward.5} parent=64 // pred_check
          %p306 = pneg %p305
        $region75: #{discriminator_forward.5} parent=64 // pred_check_branch
          %308 = sbr.rel (%p306) target = $region77
        $region76: #{discriminator_forward.5} parent=64 // pred_region
          %v309 = vld [vmem:[%s3] sm:$0xff]
          %v310 = vadd.f32 %v309, %v294
          %vm311 = vcmask 7168
          %312 = vst.msk [vmem:[%s3] sm:$0xff] %vm311, %v310
          %v313 = vld [vmem:[%s4] sm:$0xff]
          %v314 = vadd.f32 %v313, %v297
          %315 = vst.msk [vmem:[%s4] sm:$0xff] %vm311, %v314
        $region77: #{discriminator_forward.5} parent=64 // pred_fallthru
          _
        %p316 = scmp.lt.s32.totalorder %s16, 1
        %s317 = scalar_select %p316, %s16, 1
        %s318 = smul.addr %s317, 8
        %s319 = scalar_lea.vmem %s2, %s318
        // Predicated region
        $region78: #{discriminator_forward.5} parent=64 // pred_check
          %p320 = pneg %p81
        $region79: #{discriminator_forward.5} parent=64 // pred_check_branch
          %322 = sbr.rel (%p320) target = $region81
        $region80: #{discriminator_forward.5} parent=64 // pred_region
          _
        $region81: #{discriminator_forward.5} parent=64 // pred_fallthru
          _
        // Predicated region
        $region82: #{discriminator_forward.5} parent=64 // pred_check
          %p323 = pneg %p102
        $region83: #{discriminator_forward.5} parent=64 // pred_check_branch
          %325 = sbr.rel (%p323) target = $region85
        $region84: #{discriminator_forward.5} parent=64 // pred_region
          _
        $region85: #{discriminator_forward.5} parent=64 // pred_fallthru
          _
        // Predicated region
        $region86: #{discriminator_forward.5} parent=64 // pred_check
          %p326 = pneg %p123
        $region87: #{discriminator_forward.5} parent=64 // pred_check_branch
          %328 = sbr.rel (%p326) target = $region89
        $region88: #{discriminator_forward.5} parent=64 // pred_region
          _
        $region89: #{discriminator_forward.5} parent=64 // pred_fallthru
          _
        // Predicated region
        $region90: #{discriminator_forward.5} parent=64 // pred_check
          %p329 = pneg %p102
        $region91: #{discriminator_forward.5} parent=64 // pred_check_branch
          %331 = sbr.rel (%p329) target = $region93
        $region92: #{discriminator_forward.5} parent=64 // pred_region
          _
        $region93: #{discriminator_forward.5} parent=64 // pred_fallthru
          _
        // Predicated region
        $region94: #{discriminator_forward.5} parent=64 // pred_check
          %p332 = pneg %p123
        $region95: #{discriminator_forward.5} parent=64 // pred_check_branch
          %334 = sbr.rel (%p332) target = $region97
        $region96: #{discriminator_forward.5} parent=64 // pred_region
          _
        $region97: #{discriminator_forward.5} parent=64 // pred_fallthru
          _
      $region65: #{discriminator_forward.5} parent=5 // pred_fallthru
        _
      %p335 = scmp.le.s32.totalorder 2, %s11
      // Predicated region
      $region98: #{discriminator_forward.5} parent=5 // pred_check
        %p336 = pneg %p335
      $region99: #{discriminator_forward.5} parent=5 // pred_check_branch
        %338 = sbr.rel (%p336) target = $region101
      $region100: #{discriminator_forward.5} parent=5 // pred_region
        %s339 = ssub.s32 %s11, 2
        // Predicated region
        $region102: #{discriminator_forward.5} parent=100 // pred_check
          %p340 = pneg %p87
        $region103: #{discriminator_forward.5} parent=100 // pred_check_branch
          %342 = sbr.rel (%p340) target = $region105
        $region104: #{discriminator_forward.5} parent=100 // pred_region
          %p343 = scmp.lt.s32.totalorder %s17, 1
          %s344 = scalar_select %p343, %s17, 1
          %s345 = smul.addr %s344, 8
          %s346 = scalar_lea.vmem %s2, %s345
        $region105: #{discriminator_forward.5} parent=100 // pred_fallthru
          _
      $region101: #{discriminator_forward.5} parent=5 // pred_fallthru
        _
    $region6: #{discriminator_forward.5} parent=1 // loop_footer
      %s15 = sadd.s32 1, %s11
    $region7: #{discriminator_forward.5} parent=1 // loop_footer_branch
      %10 = sbr.rel target = $region3
    $region8: #{discriminator_forward.5} parent=1 // loop_exit
      _

// kernel: discriminator_forward.8
$region0: #{discriminator_forward.8}
  #allocation0 [shape = 'u32[]', space=smem, size = 0x4, offset = 0x4, fixed_abs, tag = 'smem constant byte address 0x4 - core index']
  #allocation1 [shape = 'u32[144,128]{1,0:T(1,128)}', space=vmem, size = 0x12000, scoped, tag = 'internal scratch']
  %s0 = inlined_call_operand.vmem [shape: f32[8,64], index: 0, kind: input, shape index: {}]
  %s1 = inlined_call_operand.vmem [shape: f32[8,1], index: 1, kind: input, shape index: {}]
  %s2 = inlined_call_operand.vmem [shape: f32[8,1], index: 2, kind: input, shape index: {}]
  %s3 = inlined_call_operand.vmem [shape: f32[8,1], index: 3, kind: input, shape index: {}]
  %s4 = inlined_call_operand.vmem [shape: f32[8,1], index: 4, kind: input, shape index: {}]
  %s5 = inlined_call_operand.vmem [shape: bf16[8,64], index: 5, kind: output, shape index: {}]
  %s6 = sld [smem:[#allocation0]]
  $region30: #{discriminator_forward.8} parent=0
    _
  %s8 = ssub.s32 1, %s6
  %s9 = scalar_select 0, %s8, %s6
  // Predicated region
  $region2: #{discriminator_forward.8} parent=0 // pred_check
    _
  $region3: #{discriminator_forward.8} parent=0 // pred_check_branch
    %11 = sbr.rel (0) target = $region5
  $region4: #{discriminator_forward.8} parent=0 // pred_region
    _
  $region5: #{discriminator_forward.8} parent=0 // pred_fallthru
    _
  // Predicated region
  $region6: #{discriminator_forward.8} parent=0 // pred_check
    _
  $region7: #{discriminator_forward.8} parent=0 // pred_check_branch
    %13 = sbr.rel (0) target = $region9
  $region8: #{discriminator_forward.8} parent=0 // pred_region
    _
  $region9: #{discriminator_forward.8} parent=0 // pred_fallthru
    _
  // Predicated region
  $region10: #{discriminator_forward.8} parent=0 // pred_check
    _
  $region11: #{discriminator_forward.8} parent=0 // pred_check_branch
    %15 = sbr.rel (0) target = $region13
  $region12: #{discriminator_forward.8} parent=0 // pred_region
    _
  $region13: #{discriminator_forward.8} parent=0 // pred_fallthru
    _
  // Predicated region
  $region14: #{discriminator_forward.8} parent=0 // pred_check
    _
  $region15: #{discriminator_forward.8} parent=0 // pred_check_branch
    %17 = sbr.rel (0) target = $region17
  $region16: #{discriminator_forward.8} parent=0 // pred_region
    _
  $region17: #{discriminator_forward.8} parent=0 // pred_fallthru
    _
  // Predicated region
  $region18: #{discriminator_forward.8} parent=0 // pred_check
    _
  $region19: #{discriminator_forward.8} parent=0 // pred_check_branch
    %19 = sbr.rel (0) target = $region21
  $region20: #{discriminator_forward.8} parent=0 // pred_region
    _
  $region21: #{discriminator_forward.8} parent=0 // pred_fallthru
    _
  %v20 = vld [vmem:[%s1] sm:$0xff]
  %v21 = vmul.f32 %v20, 0.015625
  %v22 = vld [vmem:[%s2] sm:$0xff]
  %v23 = vmul.f32 %v22, 0.015625
  %v24 = vmul.f32 %v21, %v21
  %v25 = vsub.f32 %v23, %v24
  %v26 = vld [vmem:[%s3] sm:$0xff]
  %v27 = vadd.f32 %v25, 1e-05
  %v28 = vrsqrt.pop %v27
  %v29 = vmul.f32 %v26, %v28
  %v30 = vld [vmem:[%s4] sm:$0xff]
  %v31 = vmul.f32 %v21, %v29
  %v32 = vsub.f32 %v30, %v31
  %v33 = vld [vmem:[%s0] sm:$0xff]
  %35 = vset.pattern.permute.xlu0 0
  %36 = vperm.xlu0 %35, %v29
  %v37 = vpop.permute.xlu0 %36
  %v39 = vmul.f32 %v33, %v37
  %41 = vset.pattern.permute.xlu0 0
  %42 = vperm.xlu0 %41, %v32
  %v43 = vpop.permute.xlu0 %42
  %v45 = vadd.f32 %v39, %v43
  %v46 = vmax.f32 %v45, 0.0
  %v47 = vpack.c.bf16 %v46, %v46
  %vm48 = vcmask 519168
  %49 = vst.msk [vmem:[%s5] sm:$0xf] %vm48, %v47
  // Predicated region
  $region22: #{discriminator_forward.8} parent=0 // pred_check
    _
  $region23: #{discriminator_forward.8} parent=0 // pred_check_branch
    %51 = sbr.rel (0) target = $region25
  $region24: #{discriminator_forward.8} parent=0 // pred_region
    _
  $region25: #{discriminator_forward.8} parent=0 // pred_fallthru
    _
  // Predicated region
  $region26: #{discriminator_forward.8} parent=0 // pred_check
    _
  $region27: #{discriminator_forward.8} parent=0 // pred_check_branch
    %53 = sbr.rel (0) target = $region29
  $region28: #{discriminator_forward.8} parent=0 // pred_region
    _
  $region29: #{discriminator_forward.8} parent=0 // pred_fallthru
    _

// kernel: discriminator_forward.7
$region0: #{discriminator_forward.7}
  #allocation0 [shape = 'u32[]', space=smem, size = 0x4, offset = 0x4, fixed_abs, tag = 'smem constant byte address 0x4 - core index']
  #allocation1 [shape = 'u32[144,128]{1,0:T(1,128)}', space=vmem, size = 0x12000, scoped, tag = 'internal scratch']
  %s0 = inlined_call_operand.vmem [shape: bf16[8,128], index: 0, kind: input, shape index: {}]
  %s1 = inlined_call_operand.vmem [shape: bf16[128,64], index: 1, kind: input, shape index: {}]
  %s2 = inlined_call_operand.vmem [shape: f32[8,64], index: 2, kind: output, shape index: {0}]
  %s3 = inlined_call_operand.vmem [shape: f32[8,1], index: 3, kind: output, shape index: {1}]
  %s4 = inlined_call_operand.vmem [shape: f32[8,1], index: 4, kind: output, shape index: {2}]
  %5 = xla_tuple %s2, %s3, %s4
  %s6 = sld [smem:[#allocation0]]
  $region42: #{discriminator_forward.7} parent=0
    _
  %s8 = ssub.s32 1, %s6
  %s9 = scalar_select 0, %s8, %s6
  // Predicated region
  $region2: #{discriminator_forward.7} parent=0 // pred_check
    _
  $region3: #{discriminator_forward.7} parent=0 // pred_check_branch
    %11 = sbr.rel (0) target = $region5
  $region4: #{discriminator_forward.7} parent=0 // pred_region
    _
  $region5: #{discriminator_forward.7} parent=0 // pred_fallthru
    _
  // Predicated region
  $region6: #{discriminator_forward.7} parent=0 // pred_check
    _
  $region7: #{discriminator_forward.7} parent=0 // pred_check_branch
    %13 = sbr.rel (0) target = $region9
  $region8: #{discriminator_forward.7} parent=0 // pred_region
    _
  $region9: #{discriminator_forward.7} parent=0 // pred_fallthru
    _
  %v15 = vld [vmem:[%s0] sm:$0xf]
  %v16 = vld [vmem:[%s1] sm:$0xf]
  %v17 = vld [vmem:[%s1 + $0x4] sm:$0xf]
  %v18 = vld [vmem:[%s1 + $0x8] sm:$0xf]
  %v19 = vld [vmem:[%s1 + $0xc] sm:$0xf]
  %v20 = vld [vmem:[%s1 + $0x10] sm:$0xf]
  %v21 = vld [vmem:[%s1 + $0x14] sm:$0xf]
  %v22 = vld [vmem:[%s1 + $0x18] sm:$0xf]
  %v23 = vld [vmem:[%s1 + $0x1c] sm:$0xf]
  %v24 = vld [vmem:[%s1 + $0x20] sm:$0xf]
  %v25 = vld [vmem:[%s1 + $0x24] sm:$0xf]
  %v26 = vld [vmem:[%s1 + $0x28] sm:$0xf]
  %v27 = vld [vmem:[%s1 + $0x2c] sm:$0xf]
  %v28 = vld [vmem:[%s1 + $0x30] sm:$0xf]
  %v29 = vld [vmem:[%s1 + $0x34] sm:$0xf]
  %v30 = vld [vmem:[%s1 + $0x38] sm:$0xf]
  %v31 = vld [vmem:[%s1 + $0x3c] sm:$0xf]
  %v48 = vunpack.c.l.b16 %v16
  %v49 = vunpack.c.l.b16 %v17
  %v50 = vunpack.c.l.b16 %v18
  %v51 = vunpack.c.l.b16 %v19
  %v52 = vunpack.c.l.b16 %v20
  %v53 = vunpack.c.l.b16 %v21
  %v54 = vunpack.c.l.b16 %v22
  %v55 = vunpack.c.l.b16 %v23
  %v56 = vunpack.c.l.b16 %v24
  %v57 = vunpack.c.l.b16 %v25
  %v58 = vunpack.c.l.b16 %v26
  %v59 = vunpack.c.l.b16 %v27
  %v60 = vunpack.c.l.b16 %v28
  %v61 = vunpack.c.l.b16 %v29
  %v62 = vunpack.c.l.b16 %v30
  %v63 = vunpack.c.l.b16 %v31
  %v64 = vpack.c.b16 %v49, %v48
  %v65 = vpack.c.b16 %v51, %v50
  %v66 = vpack.c.b16 %v53, %v52
  %v67 = vpack.c.b16 %v55, %v54
  %v68 = vpack.c.b16 %v57, %v56
  %v69 = vpack.c.b16 %v59, %v58
  %v70 = vpack.c.b16 %v61, %v60
  %v71 = vpack.c.b16 %v63, %v62
  %80 = vmatprep.subr.bf16.mxu0 0
  %81 = vmatpush1.bf16.msra.mxu0 %v71
  %82 = vmatprep.subr.bf16.mxu0 0
  %83 = vmatpush1.bf16.msra.mxu0 %v70
  %84 = vmatprep.subr.bf16.mxu0 0
  %85 = vmatpush1.bf16.msra.mxu0 %v69
  %86 = vmatprep.subr.bf16.mxu0 0
  %87 = vmatpush1.bf16.msra.mxu0 %v68
  %88 = vmatprep.subr.bf16.mxu0 0
  %89 = vmatpush1.bf16.msra.mxu0 %v67
  %90 = vmatprep.subr.bf16.mxu0 0
  %91 = vmatpush1.bf16.msra.mxu0 %v66
  %92 = vmatprep.subr.bf16.mxu0 0
  %93 = vmatpush1.bf16.msra.mxu0 %v65
  %94 = vmatprep.subr.bf16.mxu0 0
  %95 = vmatpush1.bf16.msra.mxu0 %v64
  %96 = vmatprep.subr.bf16.mxu0 0
  %97 = vmatpush2.bf16.msra.mxu0 0
  %98 = vmatprep.subr.bf16.mxu0 0
  %99 = vmatpush2.bf16.msra.mxu0 0
  %100 = vmatprep.subr.bf16.mxu0 0
  %101 = vmatpush2.bf16.msra.mxu0 0
  %102 = vmatprep.subr.bf16.mxu0 0
  %103 = vmatpush2.bf16.msra.mxu0 0
  %104 = vmatprep.subr.bf16.mxu0 0
  %105 = vmatpush2.bf16.msra.mxu0 0
  %106 = vmatprep.subr.bf16.mxu0 0
  %107 = vmatpush2.bf16.msra.mxu0 0
  %108 = vmatprep.subr.bf16.mxu0 0
  %109 = vmatpush2.bf16.msra.mxu0 0
  %110 = vmatprep.subr.bf16.mxu0 0
  %111 = vmatpush2.bf16.msra.mxu0 0
  %112 = vmatprep.mubr.bf16.mxu0 0
  %113 = vmatmul.mubr.bf16.gmra.mxu0 %v15
  %v114 = vpop.f32.mrf.mxu0
  %v115 = vadd.f32 0.0, %v114
  %v116 = vpop.f32.mrf.mxu0
  %v117 = vpop.f32.mrf.mxu0
  %v118 = vpop.f32.mrf.mxu0
  %119 = vdwg.mxu0
  %vm120 = vcmask 523264
  %121 = vst.msk [vmem:[%s2] sm:$0xff] %vm120, %v115
  %v122 = vsel %vm120, %v115, 0.0
  %123 = vadd.xlane.f32.xlu0 %v122
  %v124 = vpop.xlane.xlu0 %123
  %v125 = vmul.f32 %v115, %v115
  %v126 = vsel %vm120, %v125, 0.0
  %127 = vadd.xlane.f32.xlu0 %v126
  %v128 = vpop.xlane.xlu0 %127
  %p129 = scmp.eq.s32.totalorder 0, 0
  // Predicated region
  $region10: #{discriminator_forward.7} parent=0 // pred_check
    %p130 = pneg %p129
  $region11: #{discriminator_forward.7} parent=0 // pred_check_branch
    %132 = sbr.rel (%p130) target = $region13
  $region12: #{discriminator_forward.7} parent=0 // pred_region
    %vm133 = vcmask 7168
    %134 = vst.msk [vmem:[%s3] sm:$0xff] %vm133, %v124
    %135 = vst.msk [vmem:[%s4] sm:$0xff] %vm133, %v128
  $region13: #{discriminator_forward.7} parent=0 // pred_fallthru
    _
  %p136 = scmp.ne.s32.totalorder 0, 0
  // Predicated region
  $region14: #{discriminator_forward.7} parent=0 // pred_check
    %p137 = pneg %p136
  $region15: #{discriminator_forward.7} parent=0 // pred_check_branch
    %139 = sbr.rel (%p137) target = $region17
  $region16: #{discriminator_forward.7} parent=0 // pred_region
    %v140 = vld [vmem:[%s3] sm:$0xff]
    %v141 = vadd.f32 %v140, %v124
    %vm142 = vcmask 7168
    %143 = vst.msk [vmem:[%s3] sm:$0xff] %vm142, %v141
    %v144 = vld [vmem:[%s4] sm:$0xff]
    %v145 = vadd.f32 %v144, %v128
    %146 = vst.msk [vmem:[%s4] sm:$0xff] %vm142, %v145
  $region17: #{discriminator_forward.7} parent=0 // pred_fallthru
    _
  // Predicated region
  $region18: #{discriminator_forward.7} parent=0 // pred_check
    _
  $region19: #{discriminator_forward.7} parent=0 // pred_check_branch
    %148 = sbr.rel (0) target = $region21
  $region20: #{discriminator_forward.7} parent=0 // pred_region
    _
  $region21: #{discriminator_forward.7} parent=0 // pred_fallthru
    _
  // Predicated region
  $region22: #{discriminator_forward.7} parent=0 // pred_check
    _
  $region23: #{discriminator_forward.7} parent=0 // pred_check_branch
    %150 = sbr.rel (0) target = $region25
  $region24: #{discriminator_forward.7} parent=0 // pred_region
    _
  $region25: #{discriminator_forward.7} parent=0 // pred_fallthru
    _
  // Predicated region
  $region26: #{discriminator_forward.7} parent=0 // pred_check
    _
  $region27: #{discriminator_forward.7} parent=0 // pred_check_branch
    %152 = sbr.rel (0) target = $region29
  $region28: #{discriminator_forward.7} parent=0 // pred_region
    _
  $region29: #{discriminator_forward.7} parent=0 // pred_fallthru
    _
  // Predicated region
  $region30: #{discriminator_forward.7} parent=0 // pred_check
    _
  $region31: #{discriminator_forward.7} parent=0 // pred_check_branch
    %154 = sbr.rel (0) target = $region33
  $region32: #{discriminator_forward.7} parent=0 // pred_region
    _
  $region33: #{discriminator_forward.7} parent=0 // pred_fallthru
    _
  // Predicated region
  $region34: #{discriminator_forward.7} parent=0 // pred_check
    _
  $region35: #{discriminator_forward.7} parent=0 // pred_check_branch
    %156 = sbr.rel (0) target = $region37
  $region36: #{discriminator_forward.7} parent=0 // pred_region
    _
  $region37: #{discriminator_forward.7} parent=0 // pred_fallthru
    _
  // Predicated region
  $region38: #{discriminator_forward.7} parent=0 // pred_check
    _
  $region39: #{discriminator_forward.7} parent=0 // pred_check_branch
    %158 = sbr.rel (0) target = $region41
  $region40: #{discriminator_forward.7} parent=0 // pred_region
    _
  $region41: #{discriminator_forward.7} parent=0 // pred_fallthru
    _

// kernel: discriminator_forward.9
$region0: #{discriminator_forward.9}
  #allocation0 [shape = 'u32[]', space=smem, size = 0x4, offset = 0x4, fixed_abs, tag = 'smem constant byte address 0x4 - core index']
  #allocation1 [shape = 'u32[144,128]{1,0:T(1,128)}', space=vmem, size = 0x12000, scoped, tag = 'internal scratch']
  #allocation2 [shape = 'f32[1,1]{1,0:T(1,128)S(1)}', space=vmem, size = 0x200, scoped, tag = 'scoped memory for discriminator_forward.9']
  %s0 = inlined_call_operand.vmem [shape: bf16[128,4], index: 0, kind: input, shape index: {}]
  %s1 = inlined_call_operand.vmem [shape: bf16[8,128], index: 1, kind: input, shape index: {}]
  %s2 = inlined_call_operand.vmem [shape: f32[8,1], index: 2, kind: input, shape index: {}]
  %s3 = inlined_call_operand.vmem [shape: f32[8,1], index: 3, kind: input, shape index: {}]
  %s4 = inlined_call_operand.vmem [shape: f32[8,1], index: 4, kind: input, shape index: {}]
  %s5 = inlined_call_operand.<no memory space> [shape: f32[1,1], index: 5, kind: input, shape index: {}]
  %s6 = inlined_call_operand.hbm [shape: f32[1,4], index: 6, kind: output, shape index: {}]
  %s7 = sld [smem:[#allocation0]]
  $region34: #{discriminator_forward.9} parent=0
    _
  %s9 = ssub.s32 1, %s7
  %s10 = scalar_select 0, %s9, %s7
  %v11 = vstv %s5
  %12 = vst [vmem:[#allocation2] sm:$0x1] %v11
  $region1: #{discriminator_forward.9} parent=0
    #allocation3 [shape = 'u8[512]{0}', space=vmem, size = 0x400, scoped, tag = 'output window, operand 0, single buffered']
    #allocation4 [shape = 's32[1]{0}', space=sflag, size = 0x4, scoped, tag = 'scoped memory for discriminator_forward.9']
    %13 = vsyncpa [#allocation4], 0
    // Predicated region
    $region2: #{discriminator_forward.9} parent=1 // pred_check
      _
    $region3: #{discriminator_forward.9} parent=1 // pred_check_branch
      %15 = sbr.rel (0) target = $region5
    $region4: #{discriminator_forward.9} parent=1 // pred_region
      _
    $region5: #{discriminator_forward.9} parent=1 // pred_fallthru
      _
    // Predicated region
    $region6: #{discriminator_forward.9} parent=1 // pred_check
      _
    $region7: #{discriminator_forward.9} parent=1 // pred_check_branch
      %17 = sbr.rel (0) target = $region9
    $region8: #{discriminator_forward.9} parent=1 // pred_region
      _
    $region9: #{discriminator_forward.9} parent=1 // pred_fallthru
      _
    // Predicated region
    $region10: #{discriminator_forward.9} parent=1 // pred_check
      _
    $region11: #{discriminator_forward.9} parent=1 // pred_check_branch
      %19 = sbr.rel (0) target = $region13
    $region12: #{discriminator_forward.9} parent=1 // pred_region
      _
    $region13: #{discriminator_forward.9} parent=1 // pred_fallthru
      _
    // Predicated region
    $region14: #{discriminator_forward.9} parent=1 // pred_check
      _
    $region15: #{discriminator_forward.9} parent=1 // pred_check_branch
      %21 = sbr.rel (0) target = $region17
    $region16: #{discriminator_forward.9} parent=1 // pred_region
      _
    $region17: #{discriminator_forward.9} parent=1 // pred_fallthru
      _
    // Predicated region
    $region18: #{discriminator_forward.9} parent=1 // pred_check
      _
    $region19: #{discriminator_forward.9} parent=1 // pred_check_branch
      %23 = sbr.rel (0) target = $region21
    $region20: #{discriminator_forward.9} parent=1 // pred_region
      _
    $region21: #{discriminator_forward.9} parent=1 // pred_fallthru
      _
    // Predicated region
    $region22: #{discriminator_forward.9} parent=1 // pred_check
      _
    $region23: #{discriminator_forward.9} parent=1 // pred_check_branch
      %25 = sbr.rel (0) target = $region25
    $region24: #{discriminator_forward.9} parent=1 // pred_region
      _
    $region25: #{discriminator_forward.9} parent=1 // pred_fallthru
      _
    %v27 = vld [vmem:[%s1] sm:$0xf]
    %v28 = vld [vmem:[%s0] sm:$0xf]
    %v29 = vld [vmem:[%s0 + $0x4] sm:$0xf]
    %v30 = vld [vmem:[%s0 + $0x8] sm:$0xf]
    %v31 = vld [vmem:[%s0 + $0xc] sm:$0xf]
    %v32 = vld [vmem:[%s0 + $0x10] sm:$0xf]
    %v33 = vld [vmem:[%s0 + $0x14] sm:$0xf]
    %v34 = vld [vmem:[%s0 + $0x18] sm:$0xf]
    %v35 = vld [vmem:[%s0 + $0x1c] sm:$0xf]
    %v36 = vld [vmem:[%s0 + $0x20] sm:$0xf]
    %v37 = vld [vmem:[%s0 + $0x24] sm:$0xf]
    %v38 = vld [vmem:[%s0 + $0x28] sm:$0xf]
    %v39 = vld [vmem:[%s0 + $0x2c] sm:$0xf]
    %v40 = vld [vmem:[%s0 + $0x30] sm:$0xf]
    %v41 = vld [vmem:[%s0 + $0x34] sm:$0xf]
    %v42 = vld [vmem:[%s0 + $0x38] sm:$0xf]
    %v43 = vld [vmem:[%s0 + $0x3c] sm:$0xf]
    %v60 = vunpack.c.l.b16 %v28
    %v61 = vunpack.c.l.b16 %v29
    %v62 = vunpack.c.l.b16 %v30
    %v63 = vunpack.c.l.b16 %v31
    %v64 = vunpack.c.l.b16 %v32
    %v65 = vunpack.c.l.b16 %v33
    %v66 = vunpack.c.l.b16 %v34
    %v67 = vunpack.c.l.b16 %v35
    %v68 = vunpack.c.l.b16 %v36
    %v69 = vunpack.c.l.b16 %v37
    %v70 = vunpack.c.l.b16 %v38
    %v71 = vunpack.c.l.b16 %v39
    %v72 = vunpack.c.l.b16 %v40
    %v73 = vunpack.c.l.b16 %v41
    %v74 = vunpack.c.l.b16 %v42
    %v75 = vunpack.c.l.b16 %v43
    %v76 = vpack.c.b16 %v61, %v60
    %v77 = vpack.c.b16 %v63, %v62
    %v78 = vpack.c.b16 %v65, %v64
    %v79 = vpack.c.b16 %v67, %v66
    %v80 = vpack.c.b16 %v69, %v68
    %v81 = vpack.c.b16 %v71, %v70
    %v82 = vpack.c.b16 %v73, %v72
    %v83 = vpack.c.b16 %v75, %v74
    %92 = vmatprep.subr.bf16.mxu0 0
    %93 = vmatpush1.bf16.msra.mxu0 %v83
    %94 = vmatprep.subr.bf16.mxu0 0
    %95 = vmatpush1.bf16.msra.mxu0 %v82
    %96 = vmatprep.subr.bf16.mxu0 0
    %97 = vmatpush1.bf16.msra.mxu0 %v81
    %98 = vmatprep.subr.bf16.mxu0 0
    %99 = vmatpush1.bf16.msra.mxu0 %v80
    %100 = vmatprep.subr.bf16.mxu0 0
    %101 = vmatpush1.bf16.msra.mxu0 %v79
    %102 = vmatprep.subr.bf16.mxu0 0
    %103 = vmatpush1.bf16.msra.mxu0 %v78
    %104 = vmatprep.subr.bf16.mxu0 0
    %105 = vmatpush1.bf16.msra.mxu0 %v77
    %106 = vmatprep.subr.bf16.mxu0 0
    %107 = vmatpush1.bf16.msra.mxu0 %v76
    %108 = vmatprep.subr.bf16.mxu0 0
    %109 = vmatpush2.bf16.msra.mxu0 0
    %110 = vmatprep.subr.bf16.mxu0 0
    %111 = vmatpush2.bf16.msra.mxu0 0
    %112 = vmatprep.subr.bf16.mxu0 0
    %113 = vmatpush2.bf16.msra.mxu0 0
    %114 = vmatprep.subr.bf16.mxu0 0
    %115 = vmatpush2.bf16.msra.mxu0 0
    %116 = vmatprep.subr.bf16.mxu0 0
    %117 = vmatpush2.bf16.msra.mxu0 0
    %118 = vmatprep.subr.bf16.mxu0 0
    %119 = vmatpush2.bf16.msra.mxu0 0
    %120 = vmatprep.subr.bf16.mxu0 0
    %121 = vmatpush2.bf16.msra.mxu0 0
    %122 = vmatprep.subr.bf16.mxu0 0
    %123 = vmatpush2.bf16.msra.mxu0 0
    %124 = vmatprep.mubr.bf16.mxu0 0
    %125 = vmatmul.mubr.bf16.gmra.mxu0 %v27
    %v126 = vpop.f32.mrf.mxu0
    %v127 = vadd.f32 0.0, %v126
    %v128 = vpop.f32.mrf.mxu0
    %v129 = vpop.f32.mrf.mxu0
    %v130 = vpop.f32.mrf.mxu0
    %131 = vdwg.mxu0
    %vm132 = vcmask 31744
    %v133 = vsel %vm132, %v127, 0.0
    %134 = vadd.xlane.f32.xlu0 %v133
    %v135 = vpop.xlane.xlu0 %134
    %v136 = vrcp.pop 4.0
    %v137 = vmul.f32 %v135, %v136
    %v138 = vmul.f32 %v127, %v127
    %v139 = vsel %vm132, %v138, 0.0
    %140 = vadd.xlane.f32.xlu0 %v139
    %v141 = vpop.xlane.xlu0 %140
    %v142 = vmul.f32 %v141, %v136
    %v143 = vmul.f32 %v137, %v137
    %v144 = vsub.f32 %v142, %v143
    %v145 = vld [vmem:[%s2] sm:$0xff]
    %v146 = vadd.f32 %v144, 1e-05
    %v147 = vrsqrt.pop %v146
    %v148 = vmul.f32 %v145, %v147
    %v149 = vld [vmem:[%s3] sm:$0xff]
    %v150 = vmul.f32 %v137, %v148
    %v151 = vsub.f32 %v149, %v150
    %153 = vset.pattern.permute.xlu0 0
    %154 = vperm.xlu0 %153, %v148
    %v155 = vpop.permute.xlu0 %154
    %v157 = vmul.f32 %v127, %v155
    %159 = vset.pattern.permute.xlu0 0
    %160 = vperm.xlu0 %159, %v151
    %v161 = vpop.permute.xlu0 %160
    %v163 = vadd.f32 %v157, %v161
    %v164 = vmax.f32 %v163, 0.0
    %v165 = vld [vmem:[%s4] sm:$0xff]
    %167 = vset.pattern.permute.xlu0 0
    %168 = vperm.xlu0 %167, %v165
    %v169 = vpop.permute.xlu0 %168
    %v171 = vmul.f32 %v164, %v169
    %v172 = vsel %vm132, %v171, 0.0
    %v173 = vrot.slane %v172, 4
    %v174 = vadd.f32 %v172, %v173
    %v175 = vrot.slane %v174, 2
    %v176 = vadd.f32 %v174, %v175
    %v177 = vrot.slane %v176, 1
    %v178 = vadd.f32 %v176, %v177
    %v179 = vld [vmem:[#allocation2] sm:$0x1]
    %181 = vset.pattern.permute.xlu0 0
    %182 = vperm.xlu0 %181, %v179
    %v183 = vpop.permute.xlu0 %182
    %v185 = vlaneseq
    %v186 = vshrl.u32 %v185, 7
    %v187 = vsub.s32 0, %v186
    %v188 = vrot.slane %v183, %v187
    %v189 = vadd.f32 %v178, %v188
    %v190 = vxor.u32 %v189, 2147483648
    %v191 = vmul.f32 %v190, 1.442695
    %v192 = vpow.pop %v191
    %v193 = vadd.f32 %v192, 1.0
    %v194 = vrcp.pop %v193
    %v195 = vmul.f32 1.0, %v194
    %vm196 = vcmask 24576
    %197 = vst.msk [vmem:[#allocation3] sm:$0x1] %vm196, %v195
    // Predicated region
    $region26: #{discriminator_forward.9} parent=1 // pred_check
      _
    $region27: #{discriminator_forward.9} parent=1 // pred_check_branch
      %199 = sbr.rel (0) target = $region29
    $region28: #{discriminator_forward.9} parent=1 // pred_region
      %s201 = ssub.s32 16, 16
      %202 = vsyncadd [#allocation4], %s201
      %s204 = sshll.u32 [#allocation3], 4
      %s205 = int_to_ptr.vmem [resolvable:$true] %s204
      %207 = dma.vmem_to_hbm [thread:$0]  %s205, 16, %s6, [#allocation4]
    $region29: #{discriminator_forward.9} parent=1 // pred_fallthru
      _
    // Predicated region
    $region30: #{discriminator_forward.9} parent=1 // pred_check
      _
    $region31: #{discriminator_forward.9} parent=1 // pred_check_branch
      %209 = sbr.rel (0) target = $region33
    $region32: #{discriminator_forward.9} parent=1 // pred_region
      %210 = dma.done [#allocation4], 16
    $region33: #{discriminator_forward.9} parent=1 // pred_fallthru
      _
    %211 = vsyncpa [#allocation4], 1

</llo_original>
